<compile_context>
chip_gen: v6e
topology: v6e:2x2x1
jax: 0.10.0
libtpu: 0.0.40
codegen_flags: <defaults>
</compile_context>

<pallas_src>
import functools

import jax
import jax.numpy as jnp
from jax.experimental import pallas as pl
from jax.experimental.pallas import tpu as pltpu

_EPS = 1e-5
_VMEM_LIMIT = 64 * 1024 * 1024


# ---------------------------------------------------------------------------
# shared in-kernel helper: SAME-padded 3x3 conv via one im2col matmul
# pad_ref : VMEM (hh+2, wh+2, Cin)  (border already zero, interior filled)
# col_ref : VMEM (hh*wh, 9*Cin)     (im2col staging)
# w_ref   : (9*Cin, Cout)           row = (dy*3+dx)*Cin + ci
# returns : (hh*wh, Cout) float32
# ---------------------------------------------------------------------------
def _im2col_conv(pad_ref, col_ref, w_ref, *, hh, wh, cin):
    m = hh * wh
    for dy in range(3):
        for dx in range(3):
            k = dy * 3 + dx
            col_ref[:, k * cin:(k + 1) * cin] = (
                pad_ref[dy:dy + hh, dx:dx + wh, :].reshape(m, cin))
    return jnp.dot(col_ref[...], w_ref[...], preferred_element_type=jnp.float32)


# --------------------- stage A: maxpool + conv1 + BN1 stats -----------------
def _pool_conv_stats_kernel(x_ref, w_ref, y_ref, sum_ref, sq_ref,
                            pad_ref, col_ref, *, H, W, Cin):
    hh, wh = H // 2, W // 2

    @pl.when(pl.program_id(0) == 0)
    def _init():
        sum_ref[...] = jnp.zeros_like(sum_ref)
        sq_ref[...] = jnp.zeros_like(sq_ref)
        pad_ref[...] = jnp.zeros_like(pad_ref)   # zero border once; persists

    x = x_ref[0]                                            # (H, W, Cin)
    # 2x2 max-pool on the VPU (sublane/major-safe reshapes only)
    xw = jnp.max(x.reshape(H, wh, 2, Cin), axis=2)          # pool along W
    xp = jnp.max(xw.reshape(hh, 2, wh, Cin), axis=1)        # pool along H

    pad_ref[1:hh + 1, 1:wh + 1, :] = xp                     # SAME padding
    acc = _im2col_conv(pad_ref, col_ref, w_ref, hh=hh, wh=wh, cin=Cin)

    y_ref[0] = acc.T                                        # (Cout, hh*wh) lane-dense
    sum_ref[0, :] += jnp.sum(acc, axis=0)                   # BN batch stats
    sq_ref[0, :] += jnp.sum(acc * acc, axis=0)


# ------------- stage B: BN1+ReLU prologue + conv2 + BN2 stats ---------------
def _bnrelu_conv_stats_kernel(y_ref, s_ref, b_ref, w_ref, z_ref, sum_ref, sq_ref,
                              pad_ref, col_ref, *, hh, wh, Cin):
    @pl.when(pl.program_id(0) == 0)
    def _init():
        sum_ref[...] = jnp.zeros_like(sum_ref)
        sq_ref[...] = jnp.zeros_like(sq_ref)
        pad_ref[...] = jnp.zeros_like(pad_ref)

    # BN-apply + ReLU on the channel-major block (lane-broadcast of scale/shift)
    a = jnp.maximum(y_ref[0] * s_ref[...] + b_ref[...], 0.0)   # (Cin, hh*wh)
    pad_ref[1:hh + 1, 1:wh + 1, :] = a.T.reshape(hh, wh, Cin)  # SAME padding
    acc = _im2col_conv(pad_ref, col_ref, w_ref, hh=hh, wh=wh, cin=Cin)

    z_ref[0] = acc.T
    sum_ref[0, :] += jnp.sum(acc, axis=0)
    sq_ref[0, :] += jnp.sum(acc * acc, axis=0)


# ------------------------- stage C: BN2 + ReLU ------------------------------
def _bnrelu_kernel(y_ref, s_ref, b_ref, o_ref):
    o_ref[0] = jnp.maximum(y_ref[0] * s_ref[...] + b_ref[...], 0.0)


# ---------------------------------------------------------------------------
def _scale_shift(sums, sqs, gamma, beta, count, eps=_EPS):
    # Fold batch stats + affine into per-channel scale/shift (tiny scalar glue).
    mean = sums / count
    var = jnp.maximum(sqs / count - mean * mean, 0.0)   # biased var, clamped >= 0
    scale = gamma * jax.lax.rsqrt(var + eps)
    shift = beta - mean * scale
    c = scale.shape[0]
    return scale.reshape(c, 1), shift.reshape(c, 1)


def down_forward(x_nchw, params):
    n, cin, h, w = x_nchw.shape
    assert h % 2 == 0 and w % 2 == 0, "MaxPool2d(2) needs even H, W"
    hh, wh = h // 2, w // 2
    m = hh * wh

    (w1_hwio, g1, b1), (w2_hwio, g2, b2) = params
    cmid = w1_hwio.shape[-1]
    cout = w2_hwio.shape[-1]
    w1r = w1_hwio.reshape(9 * cin, cmid)      # row = (dy*3+dx)*Cin + ci
    w2r = w2_hwio.reshape(9 * cmid, cout)

    x_nhwc = jnp.transpose(x_nchw, (0, 2, 3, 1))   # only host-side relayout

    cp_seq = pltpu.CompilerParams(dimension_semantics=("arbitrary",),
                                  vmem_limit_bytes=_VMEM_LIMIT)
    cp_par = pltpu.CompilerParams(dimension_semantics=("parallel",),
                                  vmem_limit_bytes=_VMEM_LIMIT)

    # --- stage A ------------------------------------------------------------
    y1, s1, q1 = pl.pallas_call(
        functools.partial(_pool_conv_stats_kernel, H=h, W=w, Cin=cin),
        out_shape=(jax.ShapeDtypeStruct((n, cmid, m), jnp.float32),
                   jax.ShapeDtypeStruct((1, cmid), jnp.float32),
                   jax.ShapeDtypeStruct((1, cmid), jnp.float32)),
        grid=(n,),
        in_specs=[pl.BlockSpec((1, h, w, cin), lambda i: (i, 0, 0, 0)),
                  pl.BlockSpec((9 * cin, cmid), lambda i: (0, 0))],
        out_specs=(pl.BlockSpec((1, cmid, m), lambda i: (i, 0, 0)),
                   pl.BlockSpec((1, cmid), lambda i: (0, 0)),
                   pl.BlockSpec((1, cmid), lambda i: (0, 0))),
        scratch_shapes=[pltpu.VMEM((hh + 2, wh + 2, cin), jnp.float32),
                        pltpu.VMEM((m, 9 * cin), jnp.float32)],
        compiler_params=cp_seq,
    )(x_nhwc, w1r)

    scale1, shift1 = _scale_shift(s1[0], q1[0], g1, b1, float(n * m))

    # --- stage B ------------------------------------------------------------
    y2, s2, q2 = pl.pallas_call(
        functools.partial(_bnrelu_conv_stats_kernel, hh=hh, wh=wh, Cin=cmid),
        out_shape=(jax.ShapeDtypeStruct((n, cout, m), jnp.float32),
                   jax.ShapeDtypeStruct((1, cout), jnp.float32),
                   jax.ShapeDtypeStruct((1, cout), jnp.float32)),
        grid=(n,),
        in_specs=[pl.BlockSpec((1, cmid, m), lambda i: (i, 0, 0)),
                  pl.BlockSpec((cmid, 1), lambda i: (0, 0)),
                  pl.BlockSpec((cmid, 1), lambda i: (0, 0)),
                  pl.BlockSpec((9 * cmid, cout), lambda i: (0, 0))],
        out_specs=(pl.BlockSpec((1, cout, m), lambda i: (i, 0, 0)),
                   pl.BlockSpec((1, cout), lambda i: (0, 0)),
                   pl.BlockSpec((1, cout), lambda i: (0, 0))),
        scratch_shapes=[pltpu.VMEM((hh + 2, wh + 2, cmid), jnp.float32),
                        pltpu.VMEM((m, 9 * cmid), jnp.float32)],
        compiler_params=cp_seq,
    )(y1, scale1, shift1, w2r)

    scale2, shift2 = _scale_shift(s2[0], q2[0], g2, b2, float(n * m))

    # --- stage C ------------------------------------------------------------
    out = pl.pallas_call(
        _bnrelu_kernel,
        out_shape=jax.ShapeDtypeStruct((n, cout, m), jnp.float32),
        grid=(n,),
        in_specs=[pl.BlockSpec((1, cout, m), lambda i: (i, 0, 0)),
                  pl.BlockSpec((cout, 1), lambda i: (0, 0)),
                  pl.BlockSpec((cout, 1), lambda i: (0, 0))],
        out_specs=pl.BlockSpec((1, cout, m), lambda i: (i, 0, 0)),
        compiler_params=cp_par,
    )(y2, scale2, shift2)

    # channel-major (N, C, hh*wh) == NCHW modulo a free metadata reshape
    return out.reshape(n, cout, hh, wh)


# ------------------------------ pure-JAX reference ---------------------------
def ref_down(x_nchw, params, eps=_EPS):
    n, c, h, w = x_nchw.shape
    x = jnp.max(x_nchw.reshape(n, c, h // 2, 2, w // 2, 2), axis=(3, 5))
    for w_hwio, gamma, beta in params:
        w_oihw = jnp.transpose(w_hwio, (3, 2, 0, 1))
        y = jax.lax.conv_general_dilated(
            x, w_oihw, (1, 1), "SAME",
            dimension_numbers=("NCHW", "OIHW", "NCHW"))
        mean = y.mean(axis=(0, 2, 3), keepdims=True)
        var = y.var(axis=(0, 2, 3), keepdims=True)
        y = (y - mean) * jax.lax.rsqrt(var + eps)
        y = y * gamma.reshape(1, -1, 1, 1) + beta.reshape(1, -1, 1, 1)
        x = jnp.maximum(y, 0.0)
    return x


if __name__ == "__main__":
    key = jax.random.PRNGKey(0)
    kx, k1, k2 = jax.random.split(key, 3)

    N, Cin, H, W = 2, 4, 16, 16
    Cout = 8                                      # Down(in_channels=4, out_channels=8)

    x = jax.random.normal(kx, (N, Cin, H, W), jnp.float32)

    # Conv weights (PyTorch (Cout,Cin,3,3) stored here as HWIO),
    # BatchNorm2d default init: gamma=1, beta=0.
    w1 = jax.random.normal(k1, (3, 3, Cin, Cout), jnp.float32) * 0.2
    w2 = jax.random.normal(k2, (3, 3, Cout, Cout), jnp.float32) * 0.2
    params = [
        (w1, jnp.ones((Cout,), jnp.float32), jnp.zeros((Cout,), jnp.float32)),
        (w2, jnp.ones((Cout,), jnp.float32), jnp.zeros((Cout,), jnp.float32)),
    ]

    out = jax.block_until_ready(down_forward(x, params))
    assert out.shape == (N, Cout, H // 2, W // 2), out.shape

    ref = ref_down(x, params)
    err = float(jnp.max(jnp.abs(out - ref)))
    assert err < 2e-3, f"max abs err {err}"

    print("KERNEL_OK")
</pallas_src>

<mosaic_0001>
module attributes {stable_mosaic.version = 11 : i64} {
  func.func @_pool_conv_stats_kernel(%arg0: i32, %arg1: memref<1x16x16x4xf32, #tpu.memory_space<vmem>>, %arg2: memref<36x8xf32, #tpu.memory_space<vmem>>, %arg3: memref<1x8x64xf32, #tpu.memory_space<vmem>>, %arg4: memref<1x8xf32, #tpu.memory_space<vmem>>, %arg5: memref<1x8xf32, #tpu.memory_space<vmem>>, %arg6: memref<10x10x4xf32, #tpu.memory_space<vmem>>, %arg7: memref<64x36xf32, #tpu.memory_space<vmem>>) attributes {dimension_semantics = [#tpu.dimension_semantics<arbitrary>], iteration_bounds = array<i64: 2>, scalar_prefetch = 0 : i64, scratch_operands = 2 : i64, tpu.core_type = #tpu.core_type<tc>, window_params = [{transform_indices = @transform_0, window_bounds = array<i64: 1, 16, 16, 4>}, {pipeline_mode = #tpu.pipeline_mode<synchronous>, transform_indices = @transform_1, window_bounds = array<i64: 36, 8>}, {transform_indices = @transform_2, window_bounds = array<i64: 1, 8, 64>}, {pipeline_mode = #tpu.pipeline_mode<synchronous>, transform_indices = @transform_3, window_bounds = array<i64: 1, 8>}, {pipeline_mode = #tpu.pipeline_mode<synchronous>, transform_indices = @transform_4, window_bounds = array<i64: 1, 8>}]} {
    %c0_i32 = arith.constant 0 : i32
    %0 = arith.cmpi eq, %arg0, %c0_i32 : i32
    %1 = arith.extui %0 : i1 to i32
    %c0_i32_0 = arith.constant 0 : i32
    %2 = arith.cmpi ne, %1, %c0_i32_0 : i32
    scf.if %2 {
      %cst_61 = arith.constant 0.000000e+00 : f32
      %59 = vector.broadcast %cst_61 : f32 to vector<1x8xf32>
      %c0_62 = arith.constant 0 : index
      %c0_63 = arith.constant 0 : index
      %60 = vector.load %arg4[%c0_62, %c0_63] : memref<1x8xf32, #tpu.memory_space<vmem>>, vector<1x8xf32>
      tpu.vector_store %arg4[%c0_62, %c0_63], %59 {strides = array<i32>} : memref<1x8xf32, #tpu.memory_space<vmem>>, vector<1x8xf32>,
      %cst_64 = arith.constant 0.000000e+00 : f32
      %61 = vector.broadcast %cst_64 : f32 to vector<1x8xf32>
      %c0_65 = arith.constant 0 : index
      %c0_66 = arith.constant 0 : index
      %62 = vector.load %arg5[%c0_65, %c0_66] : memref<1x8xf32, #tpu.memory_space<vmem>>, vector<1x8xf32>
      tpu.vector_store %arg5[%c0_65, %c0_66], %61 {strides = array<i32>} : memref<1x8xf32, #tpu.memory_space<vmem>>, vector<1x8xf32>,
      %cst_67 = arith.constant 0.000000e+00 : f32
      %63 = vector.broadcast %cst_67 : f32 to vector<10x10x4xf32>
      %c0_68 = arith.constant 0 : index
      %c0_69 = arith.constant 0 : index
      %c0_70 = arith.constant 0 : index
      %64 = vector.load %arg6[%c0_68, %c0_69, %c0_70] : memref<10x10x4xf32, #tpu.memory_space<vmem>>, vector<10x10x4xf32>
      tpu.vector_store %arg6[%c0_68, %c0_69, %c0_70], %63 {strides = array<i32>} : memref<10x10x4xf32, #tpu.memory_space<vmem>>, vector<10x10x4xf32>,
    } else {
    }
    %c0 = arith.constant 0 : index
    %c0_1 = arith.constant 0 : index
    %c0_2 = arith.constant 0 : index
    %c0_3 = arith.constant 0 : index
    %3 = vector.load %arg1[%c0, %c0_1, %c0_2, %c0_3] : memref<1x16x16x4xf32, #tpu.memory_space<vmem>>, vector<1x16x16x4xf32>
    %4 = vector.shape_cast %3 : vector<1x16x16x4xf32> to vector<16x16x4xf32>
    %5 = vector.shape_cast %4 : vector<16x16x4xf32> to vector<16x8x2x4xf32>
    %cst = arith.constant dense<0xFF800000> : vector<16x8x4xf32>
    %6 = vector.multi_reduction <maximumf>, %5, %cst [2] : vector<16x8x2x4xf32> to vector<16x8x4xf32>
    %7 = vector.shape_cast %6 : vector<16x8x4xf32> to vector<8x2x8x4xf32>
    %cst_4 = arith.constant dense<0xFF800000> : vector<8x8x4xf32>
    %8 = vector.multi_reduction <maximumf>, %7, %cst_4 [1] : vector<8x2x8x4xf32> to vector<8x8x4xf32>
    %c1 = arith.constant 1 : index
    %c1_5 = arith.constant 1 : index
    %c0_6 = arith.constant 0 : index
    %9 = vector.load %arg6[%c1, %c1_5, %c0_6] : memref<10x10x4xf32, #tpu.memory_space<vmem>>, vector<8x8x4xf32>
    tpu.vector_store %arg6[%c1, %c1_5, %c0_6], %8 {strides = array<i32>} : memref<10x10x4xf32, #tpu.memory_space<vmem>>, vector<8x8x4xf32>,
    %c0_7 = arith.constant 0 : index
    %c0_8 = arith.constant 0 : index
    %c0_9 = arith.constant 0 : index
    %10 = vector.load %arg6[%c0_7, %c0_8, %c0_9] : memref<10x10x4xf32, #tpu.memory_space<vmem>>, vector<8x8x4xf32>
    %11 = vector.shape_cast %10 : vector<8x8x4xf32> to vector<64x4xf32>
    %c0_10 = arith.constant 0 : index
    %c0_11 = arith.constant 0 : index
    %12 = vector.load %arg7[%c0_10, %c0_11] : memref<64x36xf32, #tpu.memory_space<vmem>>, vector<64x4xf32>
    tpu.vector_store %arg7[%c0_10, %c0_11], %11 {strides = array<i32>} : memref<64x36xf32, #tpu.memory_space<vmem>>, vector<64x4xf32>,
    %c0_12 = arith.constant 0 : index
    %c1_13 = arith.constant 1 : index
    %c0_14 = arith.constant 0 : index
    %13 = vector.load %arg6[%c0_12, %c1_13, %c0_14] : memref<10x10x4xf32, #tpu.memory_space<vmem>>, vector<8x8x4xf32>
    %14 = vector.shape_cast %13 : vector<8x8x4xf32> to vector<64x4xf32>
    %c0_15 = arith.constant 0 : index
    %c4 = arith.constant 4 : index
    %15 = vector.load %arg7[%c0_15, %c4] : memref<64x36xf32, #tpu.memory_space<vmem>>, vector<64x4xf32>
    tpu.vector_store %arg7[%c0_15, %c4], %14 {strides = array<i32>} : memref<64x36xf32, #tpu.memory_space<vmem>>, vector<64x4xf32>,
    %c0_16 = arith.constant 0 : index
    %c2 = arith.constant 2 : index
    %c0_17 = arith.constant 0 : index
    %16 = vector.load %arg6[%c0_16, %c2, %c0_17] : memref<10x10x4xf32, #tpu.memory_space<vmem>>, vector<8x8x4xf32>
    %17 = vector.shape_cast %16 : vector<8x8x4xf32> to vector<64x4xf32>
    %c0_18 = arith.constant 0 : index
    %c8 = arith.constant 8 : index
    %18 = vector.load %arg7[%c0_18, %c8] : memref<64x36xf32, #tpu.memory_space<vmem>>, vector<64x4xf32>
    tpu.vector_store %arg7[%c0_18, %c8], %17 {strides = array<i32>} : memref<64x36xf32, #tpu.memory_space<vmem>>, vector<64x4xf32>,
    %c1_19 = arith.constant 1 : index
    %c0_20 = arith.constant 0 : index
    %c0_21 = arith.constant 0 : index
    %19 = vector.load %arg6[%c1_19, %c0_20, %c0_21] : memref<10x10x4xf32, #tpu.memory_space<vmem>>, vector<8x8x4xf32>
    %20 = vector.shape_cast %19 : vector<8x8x4xf32> to vector<64x4xf32>
    %c0_22 = arith.constant 0 : index
    %c12 = arith.constant 12 : index
    %21 = vector.load %arg7[%c0_22, %c12] : memref<64x36xf32, #tpu.memory_space<vmem>>, vector<64x4xf32>
    tpu.vector_store %arg7[%c0_22, %c12], %20 {strides = array<i32>} : memref<64x36xf32, #tpu.memory_space<vmem>>, vector<64x4xf32>,
    %c1_23 = arith.constant 1 : index
    %c1_24 = arith.constant 1 : index
    %c0_25 = arith.constant 0 : index
    %22 = vector.load %arg6[%c1_23, %c1_24, %c0_25] : memref<10x10x4xf32, #tpu.memory_space<vmem>>, vector<8x8x4xf32>
    %23 = vector.shape_cast %22 : vector<8x8x4xf32> to vector<64x4xf32>
    %c0_26 = arith.constant 0 : index
    %c16 = arith.constant 16 : index
    %24 = vector.load %arg7[%c0_26, %c16] : memref<64x36xf32, #tpu.memory_space<vmem>>, vector<64x4xf32>
    tpu.vector_store %arg7[%c0_26, %c16], %23 {strides = array<i32>} : memref<64x36xf32, #tpu.memory_space<vmem>>, vector<64x4xf32>,
    %c1_27 = arith.constant 1 : index
    %c2_28 = arith.constant 2 : index
    %c0_29 = arith.constant 0 : index
    %25 = vector.load %arg6[%c1_27, %c2_28, %c0_29] : memref<10x10x4xf32, #tpu.memory_space<vmem>>, vector<8x8x4xf32>
    %26 = vector.shape_cast %25 : vector<8x8x4xf32> to vector<64x4xf32>
    %c0_30 = arith.constant 0 : index
    %c20 = arith.constant 20 : index
    %27 = vector.load %arg7[%c0_30, %c20] : memref<64x36xf32, #tpu.memory_space<vmem>>, vector<64x4xf32>
    tpu.vector_store %arg7[%c0_30, %c20], %26 {strides = array<i32>} : memref<64x36xf32, #tpu.memory_space<vmem>>, vector<64x4xf32>,
    %c2_31 = arith.constant 2 : index
    %c0_32 = arith.constant 0 : index
    %c0_33 = arith.constant 0 : index
    %28 = vector.load %arg6[%c2_31, %c0_32, %c0_33] : memref<10x10x4xf32, #tpu.memory_space<vmem>>, vector<8x8x4xf32>
    %29 = vector.shape_cast %28 : vector<8x8x4xf32> to vector<64x4xf32>
    %c0_34 = arith.constant 0 : index
    %c24 = arith.constant 24 : index
    %30 = vector.load %arg7[%c0_34, %c24] : memref<64x36xf32, #tpu.memory_space<vmem>>, vector<64x4xf32>
    tpu.vector_store %arg7[%c0_34, %c24], %29 {strides = array<i32>} : memref<64x36xf32, #tpu.memory_space<vmem>>, vector<64x4xf32>,
    %c2_35 = arith.constant 2 : index
    %c1_36 = arith.constant 1 : index
    %c0_37 = arith.constant 0 : index
    %31 = vector.load %arg6[%c2_35, %c1_36, %c0_37] : memref<10x10x4xf32, #tpu.memory_space<vmem>>, vector<8x8x4xf32>
    %32 = vector.shape_cast %31 : vector<8x8x4xf32> to vector<64x4xf32>
    %c0_38 = arith.constant 0 : index
    %c28 = arith.constant 28 : index
    %33 = vector.load %arg7[%c0_38, %c28] : memref<64x36xf32, #tpu.memory_space<vmem>>, vector<64x4xf32>
    tpu.vector_store %arg7[%c0_38, %c28], %32 {strides = array<i32>} : memref<64x36xf32, #tpu.memory_space<vmem>>, vector<64x4xf32>,
    %c2_39 = arith.constant 2 : index
    %c2_40 = arith.constant 2 : index
    %c0_41 = arith.constant 0 : index
    %34 = vector.load %arg6[%c2_39, %c2_40, %c0_41] : memref<10x10x4xf32, #tpu.memory_space<vmem>>, vector<8x8x4xf32>
    %35 = vector.shape_cast %34 : vector<8x8x4xf32> to vector<64x4xf32>
    %c0_42 = arith.constant 0 : index
    %c32 = arith.constant 32 : index
    %36 = vector.load %arg7[%c0_42, %c32] : memref<64x36xf32, #tpu.memory_space<vmem>>, vector<64x4xf32>
    tpu.vector_store %arg7[%c0_42, %c32], %35 {strides = array<i32>} : memref<64x36xf32, #tpu.memory_space<vmem>>, vector<64x4xf32>,
    %c0_43 = arith.constant 0 : index
    %c0_44 = arith.constant 0 : index
    %37 = vector.load %arg7[%c0_43, %c0_44] : memref<64x36xf32, #tpu.memory_space<vmem>>, vector<64x36xf32>
    %c0_45 = arith.constant 0 : index
    %c0_46 = arith.constant 0 : index
    %38 = vector.load %arg2[%c0_45, %c0_46] : memref<36x8xf32, #tpu.memory_space<vmem>>, vector<36x8xf32>
    %cst_47 = arith.constant dense<0.000000e+00> : vector<64x8xf32>
    %39 = tpu.matmul %37, %38, %cst_47 {dimension_numbers = #tpu.dot_dimension_numbers<[1], [0], [0], [1], [0, 0, 1, 1], [], []>} : vector<64x36xf32>, vector<36x8xf32>, vector<64x8xf32> -> vector<64x8xf32>
    %40 = tpu.transpose %39, [1, 0] : vector<64x8xf32> -> vector<8x64xf32>
    %c0_48 = arith.constant 0 : index
    %c0_49 = arith.constant 0 : index
    %c0_50 = arith.constant 0 : index
    %41 = vector.load %arg3[%c0_48, %c0_49, %c0_50] : memref<1x8x64xf32, #tpu.memory_space<vmem>>, vector<1x8x64xf32>
    %42 = vector.shape_cast %41 : vector<1x8x64xf32> to vector<8x64xf32>
    %43 = vector.shape_cast %40 : vector<8x64xf32> to vector<1x8x64xf32>
    tpu.vector_store %arg3[%c0_48, %c0_49, %c0_50], %43 {strides = array<i32>} : memref<1x8x64xf32, #tpu.memory_space<vmem>>, vector<1x8x64xf32>,
    %c0_51 = arith.constant 0 : index
    %c0_52 = arith.constant 0 : index
    %44 = vector.load %arg4[%c0_51, %c0_52] : memref<1x8xf32, #tpu.memory_space<vmem>>, vector<1x8xf32>
    %45 = vector.shape_cast %44 : vector<1x8xf32> to vector<8xf32>
    %cst_53 = arith.constant dense<0.000000e+00> : vector<8xf32>
    %46 = vector.multi_reduction <add>, %39, %cst_53 [0] : vector<64x8xf32> to vector<8xf32>
    %47 = arith.addf %45, %46 : vector<8xf32>
    %c0_54 = arith.constant 0 : index
    %c0_55 = arith.constant 0 : index
    %48 = vector.load %arg4[%c0_54, %c0_55] : memref<1x8xf32, #tpu.memory_space<vmem>>, vector<1x8xf32>
    %49 = vector.shape_cast %48 : vector<1x8xf32> to vector<8xf32>
    %50 = vector.shape_cast %47 : vector<8xf32> to vector<1x8xf32>
    tpu.vector_store %arg4[%c0_54, %c0_55], %50 {strides = array<i32>} : memref<1x8xf32, #tpu.memory_space<vmem>>, vector<1x8xf32>,
    %c0_56 = arith.constant 0 : index
    %c0_57 = arith.constant 0 : index
    %51 = vector.load %arg5[%c0_56, %c0_57] : memref<1x8xf32, #tpu.memory_space<vmem>>, vector<1x8xf32>
    %52 = vector.shape_cast %51 : vector<1x8xf32> to vector<8xf32>
    %53 = arith.mulf %39, %39 : vector<64x8xf32>
    %cst_58 = arith.constant dense<0.000000e+00> : vector<8xf32>
    %54 = vector.multi_reduction <add>, %53, %cst_58 [0] : vector<64x8xf32> to vector<8xf32>
    %55 = arith.addf %52, %54 : vector<8xf32>
    %c0_59 = arith.constant 0 : index
    %c0_60 = arith.constant 0 : index
    %56 = vector.load %arg5[%c0_59, %c0_60] : memref<1x8xf32, #tpu.memory_space<vmem>>, vector<1x8xf32>
    %57 = vector.shape_cast %56 : vector<1x8xf32> to vector<8xf32>
    %58 = vector.shape_cast %55 : vector<8xf32> to vector<1x8xf32>
    tpu.vector_store %arg5[%c0_59, %c0_60], %58 {strides = array<i32>} : memref<1x8xf32, #tpu.memory_space<vmem>>, vector<1x8xf32>,
    return
  }
  func.func @transform_0(%arg0: i32) -> (i32, i32, i32, i32) {
    %c0_i32 = arith.constant 0 : i32
    %c0_i32_0 = arith.constant 0 : i32
    %c0_i32_1 = arith.constant 0 : i32
    %c0_i32_2 = arith.constant 0 : i32
    return %arg0, %c0_i32, %c0_i32_0, %c0_i32_1 : i32, i32, i32, i32
  }
  func.func @transform_1(%arg0: i32) -> (i32, i32) {
    %c0_i32 = arith.constant 0 : i32
    %c0_i32_0 = arith.constant 0 : i32
    %c0_i32_1 = arith.constant 0 : i32
    return %c0_i32, %c0_i32_0 : i32, i32
  }
  func.func @transform_2(%arg0: i32) -> (i32, i32, i32) {
    %c0_i32 = arith.constant 0 : i32
    %c0_i32_0 = arith.constant 0 : i32
    %c0_i32_1 = arith.constant 0 : i32
    return %arg0, %c0_i32, %c0_i32_0 : i32, i32, i32
  }
  func.func @transform_3(%arg0: i32) -> (i32, i32) {
    %c0_i32 = arith.constant 0 : i32
    %c0_i32_0 = arith.constant 0 : i32
    %c0_i32_1 = arith.constant 0 : i32
    return %c0_i32, %c0_i32_0 : i32, i32
  }
  func.func @transform_4(%arg0: i32) -> (i32, i32) {
    %c0_i32 = arith.constant 0 : i32
    %c0_i32_0 = arith.constant 0 : i32
    %c0_i32_1 = arith.constant 0 : i32
    return %c0_i32, %c0_i32_0 : i32, i32
  }
}

</mosaic_0001>

<llo_original>
// kernel: tpu_custom_call.1
$region0: #{tpu_custom_call.1}
  #allocation0 [shape = 'u32[]', space=smem, size = 0x4, offset = 0x4, fixed_abs, tag = 'smem constant byte address 0x4 - core index']
  #allocation1 [shape = 'u32[144,128]{1,0:T(1,128)}', space=vmem, size = 0x12000, scoped, tag = 'internal scratch']
  #allocation2 [shape = 'f32[10,10,4]{2,1,0:T(8,128)}', space=vmem, size = 0x14000, scoped, tag = 'scratch operand']
  #allocation3 [shape = 'f32[64,36]{1,0:T(8,128)}', space=vmem, size = 0x8000, scoped, tag = 'scratch operand']
  %s0 = inlined_call_operand.vmem [shape: f32[2,16,16,4], index: 0, kind: input, shape index: {}]
  %s1 = inlined_call_operand.vmem [shape: f32[36,8], index: 1, kind: input, shape index: {}]
  %s2 = inlined_call_operand.hbm [shape: f32[2,8,64], index: 2, kind: output, shape index: {0}]
  %s3 = inlined_call_operand.hbm [shape: f32[1,8], index: 3, kind: output, shape index: {1}]
  %s4 = inlined_call_operand.hbm [shape: f32[1,8], index: 4, kind: output, shape index: {2}]
  %5 = xla_tuple %s2, %s3, %s4
  %s6 = sld [smem:[#allocation0]]
  $region61: #{tpu_custom_call.1} parent=0
    _
  %s8 = ssub.s32 1, %s6
  %s9 = scalar_select 0, %s8, %s6
  $region1: #{tpu_custom_call.1} parent=0
    #allocation4 [shape = 'u8[8192]{0}', space=vmem, size = 0x2000, scoped, tag = 'output window, operand 0']
    #allocation5 [shape = 's32[2]{0}', space=sflag, size = 0x8, scoped, tag = 'scoped memory for tpu_custom_call.1']
    #allocation6 [shape = 'u8[512]{0}', space=vmem, size = 0x400, scoped, tag = 'output window, operand 1, single buffered']
    #allocation7 [shape = 's32[1]{0}', space=sflag, size = 0x4, scoped, tag = 'scoped memory for tpu_custom_call.1']
    #allocation8 [shape = 'u8[512]{0}', space=vmem, size = 0x400, scoped, tag = 'output window, operand 2, single buffered']
    %10 = vsyncpa [#allocation5], 0
    %s11 = scalar_lea.sflag [#allocation5], 1
    %12 = vsyncpa %s11, 0
    %13 = vsyncpa [#allocation7], 0
    loop: start=0, step=1, limit=4
    $region2: #{tpu_custom_call.1} parent=1 // loop_pre_header
      _
    $region3: #{tpu_custom_call.1} parent=1 // loop_header
      %s15 = sphi 0, %s19
      %p16 = scmp.ge.s32.totalorder %s15, 4
      %s25 = sphi 0, %s27
      %s28 = sphi 0, %s25
      %s29 = sphi 0, %s28
      %s45 = sphi 0, %s29
      %s49 = sphi 0, %s49
      %s51 = sphi 0, %s49
      %s52 = sphi 0, %s51
      %s66 = sphi 0, %s52
      %s72 = sphi 0, %s74
      %s75 = sphi 0, %s72
      %s76 = sphi 0, %s75
      %s92 = sphi 0, %s76
      %s96 = sphi 0, %s96
      %s98 = sphi 0, %s96
      %s99 = sphi 0, %s98
      %s113 = sphi 0, %s99
      %s117 = sphi 0, %s117
      %s119 = sphi 0, %s117
      %s120 = sphi 0, %s119
      %s134 = sphi 0, %s120
    $region4: #{tpu_custom_call.1} parent=1 // loop_header_branch
      %18 = sbr.rel (%p16) target = $region8
    $region5: #{tpu_custom_call.1} parent=1 // loop_body
      %s20 = ssub.s32 %s15, 1
      %s21 = ssub.s32 %s15, 2
      %s22 = sadd.s32 %s15, 1
      %s23 = ssub.s32 %s15, %s22
      %p24 = scmp.eq.s32.totalorder %s23, 0
      %s26 = sadd.s32 %s25, 1
      %s27 = scalar_select %p24, %s25, %s26
      %p30 = pneg %p24
      %p31 = scmp.eq.s32.totalorder %s15, 1
      %p32 = por %p30, %p31
      %p33 = scmp.ne.s32.totalorder %s25, %s28
      %p34 = scmp.eq.s32.totalorder %s15, 0
      %p35 = por %p33, %p34
      %p36 = scmp.ne.s32.totalorder %s25, %s28
      %p37 = scmp.eq.s32.totalorder %s20, 1
      %p38 = por %p36, %p37
      %p39 = scmp.ne.s32.totalorder %s28, %s29
      %p40 = scmp.eq.s32.totalorder %s20, 0
      %p41 = por %p39, %p40
      %p42 = scmp.ne.s32.totalorder %s28, %s29
      %p43 = scmp.eq.s32.totalorder %s21, 1
      %p44 = por %p42, %p43
      %p46 = scmp.ne.s32.totalorder %s29, %s45
      %p47 = scmp.eq.s32.totalorder %s21, 0
      %p48 = por %p46, %p47
      %s50 = sadd.s32 %s49, 1
      %p53 = scmp.eq.s32.totalorder %s15, 1
      %p54 = scmp.ne.s32.totalorder %s49, %s51
      %p55 = scmp.eq.s32.totalorder %s15, 0
      %p56 = por %p54, %p55
      %p57 = scmp.ne.s32.totalorder %s49, %s51
      %p58 = scmp.eq.s32.totalorder %s20, 1
      %p59 = por %p57, %p58
      %p60 = scmp.ne.s32.totalorder %s51, %s52
      %p61 = scmp.eq.s32.totalorder %s20, 0
      %p62 = por %p60, %p61
      %p63 = scmp.ne.s32.totalorder %s51, %s52
      %p64 = scmp.eq.s32.totalorder %s21, 1
      %p65 = por %p63, %p64
      %p67 = scmp.ne.s32.totalorder %s52, %s66
      %p68 = scmp.eq.s32.totalorder %s21, 0
      %p69 = por %p67, %p68
      %s70 = ssub.s32 %s15, %s22
      %p71 = scmp.eq.s32.totalorder %s70, 0
      %s73 = sadd.s32 %s72, 1
      %s74 = scalar_select %p71, %s72, %s73
      %p77 = pneg %p71
      %p78 = scmp.eq.s32.totalorder %s15, 1
      %p79 = por %p77, %p78
      %p80 = scmp.ne.s32.totalorder %s72, %s75
      %p81 = scmp.eq.s32.totalorder %s15, 0
      %p82 = por %p80, %p81
      %p83 = scmp.ne.s32.totalorder %s72, %s75
      %p84 = scmp.eq.s32.totalorder %s20, 1
      %p85 = por %p83, %p84
      %p86 = scmp.ne.s32.totalorder %s75, %s76
      %p87 = scmp.eq.s32.totalorder %s20, 0
      %p88 = por %p86, %p87
      %p89 = scmp.ne.s32.totalorder %s75, %s76
      %p90 = scmp.eq.s32.totalorder %s21, 1
      %p91 = por %p89, %p90
      %p93 = scmp.ne.s32.totalorder %s76, %s92
      %p94 = scmp.eq.s32.totalorder %s21, 0
      %p95 = por %p93, %p94
      %s97 = sadd.s32 %s96, 1
      %p100 = scmp.eq.s32.totalorder %s15, 1
      %p101 = scmp.ne.s32.totalorder %s96, %s98
      %p102 = scmp.eq.s32.totalorder %s15, 0
      %p103 = por %p101, %p102
      %p104 = scmp.ne.s32.totalorder %s96, %s98
      %p105 = scmp.eq.s32.totalorder %s20, 1
      %p106 = por %p104, %p105
      %p107 = scmp.ne.s32.totalorder %s98, %s99
      %p108 = scmp.eq.s32.totalorder %s20, 0
      %p109 = por %p107, %p108
      %p110 = scmp.ne.s32.totalorder %s98, %s99
      %p111 = scmp.eq.s32.totalorder %s21, 1
      %p112 = por %p110, %p111
      %p114 = scmp.ne.s32.totalorder %s99, %s113
      %p115 = scmp.eq.s32.totalorder %s21, 0
      %p116 = por %p114, %p115
      %s118 = sadd.s32 %s117, 1
      %p121 = scmp.eq.s32.totalorder %s15, 1
      %p122 = scmp.ne.s32.totalorder %s117, %s119
      %p123 = scmp.eq.s32.totalorder %s15, 0
      %p124 = por %p122, %p123
      %p125 = scmp.ne.s32.totalorder %s117, %s119
      %p126 = scmp.eq.s32.totalorder %s20, 1
      %p127 = por %p125, %p126
      %p128 = scmp.ne.s32.totalorder %s119, %s120
      %p129 = scmp.eq.s32.totalorder %s20, 0
      %p130 = por %p128, %p129
      %p131 = scmp.ne.s32.totalorder %s119, %s120
      %p132 = scmp.eq.s32.totalorder %s21, 1
      %p133 = por %p131, %p132
      %p135 = scmp.ne.s32.totalorder %s120, %s134
      %p136 = scmp.eq.s32.totalorder %s21, 0
      %p137 = por %p135, %p136
      %p138 = scmp.le.s32.totalorder 1, %s15
      %p139 = scmp.lt.s32.totalorder %s15, 3
      %p140 = pnand %p138, %p139
      %p141 = pneg %p140
      // Predicated region
      $region9: #{tpu_custom_call.1} parent=5 // pred_check
        _
      $region10: #{tpu_custom_call.1} parent=5 // pred_check_branch
        %143 = sbr.rel (%p140) target = $region12
      $region11: #{tpu_custom_call.1} parent=5 // pred_region
        %s144 = ssub.s32 %s15, 1
        // Predicated region
        $region13: #{tpu_custom_call.1} parent=11 // pred_check
          %p145 = pneg %p62
        $region14: #{tpu_custom_call.1} parent=11 // pred_check_branch
          %147 = sbr.rel (%p145) target = $region16
        $region15: #{tpu_custom_call.1} parent=11 // pred_region
          _
        $region16: #{tpu_custom_call.1} parent=11 // pred_fallthru
          _
      $region12: #{tpu_custom_call.1} parent=5 // pred_fallthru
        _
      %p148 = scmp.lt.s32.totalorder %s15, 2
      // Predicated region
      $region17: #{tpu_custom_call.1} parent=5 // pred_check
        %p149 = pneg %p148
      $region18: #{tpu_custom_call.1} parent=5 // pred_check_branch
        %151 = sbr.rel (%p149) target = $region20
      $region19: #{tpu_custom_call.1} parent=5 // pred_region
        // Predicated region
        $region21: #{tpu_custom_call.1} parent=19 // pred_check
          %p152 = pneg %p35
        $region22: #{tpu_custom_call.1} parent=19 // pred_check_branch
          %154 = sbr.rel (%p152) target = $region24
        $region23: #{tpu_custom_call.1} parent=19 // pred_region
          %p155 = scmp.lt.s32.totalorder %s15, 1
          %s156 = scalar_select %p155, %s15, 1
          %s157 = smul.addr %s156, 32
          %s158 = smul.addr %s157, 8
          %s159 = scalar_lea.vmem %s0, %s158
        $region24: #{tpu_custom_call.1} parent=19 // pred_fallthru
          _
      $region20: #{tpu_custom_call.1} parent=5 // pred_fallthru
        _
      %p160 = scmp.le.s32.totalorder 1, %s15
      %p161 = scmp.lt.s32.totalorder %s15, 3
      %p162 = pnand %p160, %p161
      %p163 = pneg %p162
      // Predicated region
      $region25: #{tpu_custom_call.1} parent=5 // pred_check
        _
      $region26: #{tpu_custom_call.1} parent=5 // pred_check_branch
        %165 = sbr.rel (%p162) target = $region28
      $region27: #{tpu_custom_call.1} parent=5 // pred_region
        %s166 = ssub.s32 %s15, 1
        %p167 = scmp.lt.s32.totalorder %s20, 1
        %s168 = scalar_select %p167, %s20, 1
        %s169 = smul.addr %s168, 32
        %s170 = smul.addr %s169, 8
        %s171 = scalar_lea.vmem %s0, %s170
        %p172 = pneg %p41
        %p173 = pneg %p38
        %p174 = pneg %p62
        %p175 = pneg %p59
        %p176 = pneg %p88
        %p177 = pneg %p85
        %s178 = sand.u32 %s75, 1
        %s179 = scalar_lea.sflag [#allocation5], %s178
        %s180 = sand.u32 %s75, 1
        %s181 = smul.addr %s180, 8
        %s182 = scalar_lea.vmem [#allocation4], %s181
        %p183 = pneg %p109
        %p184 = pneg %p106
        %p185 = pneg %p130
        %p186 = pneg %p127
        %p187 = scmp.lt.s32.totalorder %s20, 1
        %s188 = scalar_select %p187, %s20, 1
        %s189 = smul.addr %s188, 32
        %s190 = smul.addr %s189, 8
        %s191 = scalar_lea.vmem %s0, %s190
        %p192 = scmp.eq.s32.totalorder %s20, 0
        // Predicated region
        $region29: #{tpu_custom_call.1} parent=27 // pred_check
          %p193 = pneg %p192
        $region30: #{tpu_custom_call.1} parent=27 // pred_check_branch
          %195 = sbr.rel (%p193) target = $region32
        $region31: #{tpu_custom_call.1} parent=27 // pred_region
          %vm196 = vcmask 57344
          %197 = vst.msk [vmem:[#allocation6] sm:$0x1] %vm196, 0.0
          %198 = vst.msk [vmem:[#allocation8] sm:$0x1] %vm196, 0.0
          %vm199 = vcmask 31744
          %200 = vst.msk [vmem:[#allocation2] sm:$0xff] %vm199, 0.0
          %vm201 = vcmask 25600
          %202 = vst.msk [vmem:[#allocation2 + $0x8] sm:$0x3] %vm201, 0.0
          %203 = vst.msk [vmem:[#allocation2 + $0x10] sm:$0xff] %vm199, 0.0
          %204 = vst.msk [vmem:[#allocation2 + $0x18] sm:$0x3] %vm201, 0.0
          %205 = vst.msk [vmem:[#allocation2 + $0x20] sm:$0xff] %vm199, 0.0
          %206 = vst.msk [vmem:[#allocation2 + $0x28] sm:$0x3] %vm201, 0.0
          %207 = vst.msk [vmem:[#allocation2 + $0x30] sm:$0xff] %vm199, 0.0
          %208 = vst.msk [vmem:[#allocation2 + $0x38] sm:$0x3] %vm201, 0.0
          %209 = vst.msk [vmem:[#allocation2 + $0x40] sm:$0xff] %vm199, 0.0
          %210 = vst.msk [vmem:[#allocation2 + $0x48] sm:$0x3] %vm201, 0.0
          %211 = vst.msk [vmem:[#allocation2 + $0x50] sm:$0xff] %vm199, 0.0
          %212 = vst.msk [vmem:[#allocation2 + $0x58] sm:$0x3] %vm201, 0.0
          %213 = vst.msk [vmem:[#allocation2 + $0x60] sm:$0xff] %vm199, 0.0
          %214 = vst.msk [vmem:[#allocation2 + $0x68] sm:$0x3] %vm201, 0.0
          %215 = vst.msk [vmem:[#allocation2 + $0x70] sm:$0xff] %vm199, 0.0
          %216 = vst.msk [vmem:[#allocation2 + $0x78] sm:$0x3] %vm201, 0.0
          %217 = vst.msk [vmem:[#allocation2 + $0x80] sm:$0xff] %vm199, 0.0
          %218 = vst.msk [vmem:[#allocation2 + $0x88] sm:$0x3] %vm201, 0.0
          %219 = vst.msk [vmem:[#allocation2 + $0x90] sm:$0xff] %vm199, 0.0
          %220 = vst.msk [vmem:[#allocation2 + $0x98] sm:$0x3] %vm201, 0.0
        $region32: #{tpu_custom_call.1} parent=27 // pred_fallthru
          _
        %v221 = vld [vmem:[%s191] sm:$0xff]
        %v222 = vld [vmem:[%s191 + $0x8] sm:$0xff]
        %v223 = vld [vmem:[%s191 + $0x10] sm:$0xff]
        %v224 = vld [vmem:[%s191 + $0x18] sm:$0xff]
        %v225 = vld [vmem:[%s191 + $0x20] sm:$0xff]
        %v226 = vld [vmem:[%s191 + $0x28] sm:$0xff]
        %v227 = vld [vmem:[%s191 + $0x30] sm:$0xff]
        %v228 = vld [vmem:[%s191 + $0x38] sm:$0xff]
        %v229 = vld [vmem:[%s191 + $0x40] sm:$0xff]
        %v230 = vld [vmem:[%s191 + $0x48] sm:$0xff]
        %v231 = vld [vmem:[%s191 + $0x50] sm:$0xff]
        %v232 = vld [vmem:[%s191 + $0x58] sm:$0xff]
        %v233 = vld [vmem:[%s191 + $0x60] sm:$0xff]
        %v234 = vld [vmem:[%s191 + $0x68] sm:$0xff]
        %v235 = vld [vmem:[%s191 + $0x70] sm:$0xff]
        %v236 = vld [vmem:[%s191 + $0x78] sm:$0xff]
        %v237 = vld [vmem:[%s191 + $0x80] sm:$0xff]
        %v238 = vld [vmem:[%s191 + $0x88] sm:$0xff]
        %v239 = vld [vmem:[%s191 + $0x90] sm:$0xff]
        %v240 = vld [vmem:[%s191 + $0x98] sm:$0xff]
        %v241 = vld [vmem:[%s191 + $0xa0] sm:$0xff]
        %v242 = vld [vmem:[%s191 + $0xa8] sm:$0xff]
        %v243 = vld [vmem:[%s191 + $0xb0] sm:$0xff]
        %v244 = vld [vmem:[%s191 + $0xb8] sm:$0xff]
        %v245 = vld [vmem:[%s191 + $0xc0] sm:$0xff]
        %v246 = vld [vmem:[%s191 + $0xc8] sm:$0xff]
        %v247 = vld [vmem:[%s191 + $0xd0] sm:$0xff]
        %v248 = vld [vmem:[%s191 + $0xd8] sm:$0xff]
        %v249 = vld [vmem:[%s191 + $0xe0] sm:$0xff]
        %v250 = vld [vmem:[%s191 + $0xe8] sm:$0xff]
        %v251 = vld [vmem:[%s191 + $0xf0] sm:$0xff]
        %v252 = vld [vmem:[%s191 + $0xf8] sm:$0xff]
        %v285 = vcombine.high %v221, %v221
        %v287 = vunpack.c.l.s4 1983009808
        %v288 = vunpack.c.0.s8 %v287
        %v289 = vlaneseq
        %v290 = vshrl.u32 %v289, 7
        %v291 = vsub.s32 %v288, %v290
        %v292 = vrot.slane %v221, %v291
        %v294 = vunpack.c.l.s4 1983009808
        %v295 = vunpack.c.0.s8 %v294
        %v296 = vlaneseq
        %v297 = vshrl.u32 %v296, 7
        %v298 = vsub.s32 %v295, %v297
        %v299 = vrot.slane %v285, %v298
        %v300 = vcombine.high %v292, %v292
        %v301 = vcombine.high %v299, %v299
        %v302 = vcombine.high %v222, %v222
        %v304 = vunpack.c.l.s4 1983009808
        %v305 = vunpack.c.0.s8 %v304
        %v306 = vlaneseq
        %v307 = vshrl.u32 %v306, 7
        %v308 = vsub.s32 %v305, %v307
        %v309 = vrot.slane %v222, %v308
        %v311 = vunpack.c.l.s4 1983009808
        %v312 = vunpack.c.0.s8 %v311
        %v313 = vlaneseq
        %v314 = vshrl.u32 %v313, 7
        %v315 = vsub.s32 %v312, %v314
        %v316 = vrot.slane %v302, %v315
        %v317 = vcombine.high %v309, %v309
        %v318 = vcombine.high %v316, %v316
        %v319 = vcombine.high %v223, %v223
        %v321 = vunpack.c.l.s4 1983009808
        %v322 = vunpack.c.0.s8 %v321
        %v323 = vlaneseq
        %v324 = vshrl.u32 %v323, 7
        %v325 = vsub.s32 %v322, %v324
        %v326 = vrot.slane %v223, %v325
        %v328 = vunpack.c.l.s4 1983009808
        %v329 = vunpack.c.0.s8 %v328
        %v330 = vlaneseq
        %v331 = vshrl.u32 %v330, 7
        %v332 = vsub.s32 %v329, %v331
        %v333 = vrot.slane %v319, %v332
        %v334 = vcombine.high %v326, %v326
        %v335 = vcombine.high %v333, %v333
        %v336 = vcombine.high %v224, %v224
        %v338 = vunpack.c.l.s4 1983009808
        %v339 = vunpack.c.0.s8 %v338
        %v340 = vlaneseq
        %v341 = vshrl.u32 %v340, 7
        %v342 = vsub.s32 %v339, %v341
        %v343 = vrot.slane %v224, %v342
        %v345 = vunpack.c.l.s4 1983009808
        %v346 = vunpack.c.0.s8 %v345
        %v347 = vlaneseq
        %v348 = vshrl.u32 %v347, 7
        %v349 = vsub.s32 %v346, %v348
        %v350 = vrot.slane %v336, %v349
        %v351 = vcombine.high %v343, %v343
        %v352 = vcombine.high %v350, %v350
        %v353 = vcombine.high %v225, %v225
        %v355 = vunpack.c.l.s4 1983009808
        %v356 = vunpack.c.0.s8 %v355
        %v357 = vlaneseq
        %v358 = vshrl.u32 %v357, 7
        %v359 = vsub.s32 %v356, %v358
        %v360 = vrot.slane %v225, %v359
        %v362 = vunpack.c.l.s4 1983009808
        %v363 = vunpack.c.0.s8 %v362
        %v364 = vlaneseq
        %v365 = vshrl.u32 %v364, 7
        %v366 = vsub.s32 %v363, %v365
        %v367 = vrot.slane %v353, %v366
        %v368 = vcombine.high %v360, %v360
        %v369 = vcombine.high %v367, %v367
        %v370 = vcombine.high %v226, %v226
        %v372 = vunpack.c.l.s4 1983009808
        %v373 = vunpack.c.0.s8 %v372
        %v374 = vlaneseq
        %v375 = vshrl.u32 %v374, 7
        %v376 = vsub.s32 %v373, %v375
        %v377 = vrot.slane %v226, %v376
        %v379 = vunpack.c.l.s4 1983009808
        %v380 = vunpack.c.0.s8 %v379
        %v381 = vlaneseq
        %v382 = vshrl.u32 %v381, 7
        %v383 = vsub.s32 %v380, %v382
        %v384 = vrot.slane %v370, %v383
        %v385 = vcombine.high %v377, %v377
        %v386 = vcombine.high %v384, %v384
        %v387 = vcombine.high %v227, %v227
        %v389 = vunpack.c.l.s4 1983009808
        %v390 = vunpack.c.0.s8 %v389
        %v391 = vlaneseq
        %v392 = vshrl.u32 %v391, 7
        %v393 = vsub.s32 %v390, %v392
        %v394 = vrot.slane %v227, %v393
        %v396 = vunpack.c.l.s4 1983009808
        %v397 = vunpack.c.0.s8 %v396
        %v398 = vlaneseq
        %v399 = vshrl.u32 %v398, 7
        %v400 = vsub.s32 %v397, %v399
        %v401 = vrot.slane %v387, %v400
        %v402 = vcombine.high %v394, %v394
        %v403 = vcombine.high %v401, %v401
        %v404 = vcombine.high %v228, %v228
        %v406 = vunpack.c.l.s4 1983009808
        %v407 = vunpack.c.0.s8 %v406
        %v408 = vlaneseq
        %v409 = vshrl.u32 %v408, 7
        %v410 = vsub.s32 %v407, %v409
        %v411 = vrot.slane %v228, %v410
        %v413 = vunpack.c.l.s4 1983009808
        %v414 = vunpack.c.0.s8 %v413
        %v415 = vlaneseq
        %v416 = vshrl.u32 %v415, 7
        %v417 = vsub.s32 %v414, %v416
        %v418 = vrot.slane %v404, %v417
        %v419 = vcombine.high %v411, %v411
        %v420 = vcombine.high %v418, %v418
        %v421 = vcombine.high %v229, %v229
        %v423 = vunpack.c.l.s4 1983009808
        %v424 = vunpack.c.0.s8 %v423
        %v425 = vlaneseq
        %v426 = vshrl.u32 %v425, 7
        %v427 = vsub.s32 %v424, %v426
        %v428 = vrot.slane %v229, %v427
        %v430 = vunpack.c.l.s4 1983009808
        %v431 = vunpack.c.0.s8 %v430
        %v432 = vlaneseq
        %v433 = vshrl.u32 %v432, 7
        %v434 = vsub.s32 %v431, %v433
        %v435 = vrot.slane %v421, %v434
        %v436 = vcombine.high %v428, %v428
        %v437 = vcombine.high %v435, %v435
        %v438 = vcombine.high %v230, %v230
        %v440 = vunpack.c.l.s4 1983009808
        %v441 = vunpack.c.0.s8 %v440
        %v442 = vlaneseq
        %v443 = vshrl.u32 %v442, 7
        %v444 = vsub.s32 %v441, %v443
        %v445 = vrot.slane %v230, %v444
        %v447 = vunpack.c.l.s4 1983009808
        %v448 = vunpack.c.0.s8 %v447
        %v449 = vlaneseq
        %v450 = vshrl.u32 %v449, 7
        %v451 = vsub.s32 %v448, %v450
        %v452 = vrot.slane %v438, %v451
        %v453 = vcombine.high %v445, %v445
        %v454 = vcombine.high %v452, %v452
        %v455 = vcombine.high %v231, %v231
        %v457 = vunpack.c.l.s4 1983009808
        %v458 = vunpack.c.0.s8 %v457
        %v459 = vlaneseq
        %v460 = vshrl.u32 %v459, 7
        %v461 = vsub.s32 %v458, %v460
        %v462 = vrot.slane %v231, %v461
        %v464 = vunpack.c.l.s4 1983009808
        %v465 = vunpack.c.0.s8 %v464
        %v466 = vlaneseq
        %v467 = vshrl.u32 %v466, 7
        %v468 = vsub.s32 %v465, %v467
        %v469 = vrot.slane %v455, %v468
        %v470 = vcombine.high %v462, %v462
        %v471 = vcombine.high %v469, %v469
        %v472 = vcombine.high %v232, %v232
        %v474 = vunpack.c.l.s4 1983009808
        %v475 = vunpack.c.0.s8 %v474
        %v476 = vlaneseq
        %v477 = vshrl.u32 %v476, 7
        %v478 = vsub.s32 %v475, %v477
        %v479 = vrot.slane %v232, %v478
        %v481 = vunpack.c.l.s4 1983009808
        %v482 = vunpack.c.0.s8 %v481
        %v483 = vlaneseq
        %v484 = vshrl.u32 %v483, 7
        %v485 = vsub.s32 %v482, %v484
        %v486 = vrot.slane %v472, %v485
        %v487 = vcombine.high %v479, %v479
        %v488 = vcombine.high %v486, %v486
        %v489 = vcombine.high %v233, %v233
        %v491 = vunpack.c.l.s4 1983009808
        %v492 = vunpack.c.0.s8 %v491
        %v493 = vlaneseq
        %v494 = vshrl.u32 %v493, 7
        %v495 = vsub.s32 %v492, %v494
        %v496 = vrot.slane %v233, %v495
        %v498 = vunpack.c.l.s4 1983009808
        %v499 = vunpack.c.0.s8 %v498
        %v500 = vlaneseq
        %v501 = vshrl.u32 %v500, 7
        %v502 = vsub.s32 %v499, %v501
        %v503 = vrot.slane %v489, %v502
        %v504 = vcombine.high %v496, %v496
        %v505 = vcombine.high %v503, %v503
        %v506 = vcombine.high %v234, %v234
        %v508 = vunpack.c.l.s4 1983009808
        %v509 = vunpack.c.0.s8 %v508
        %v510 = vlaneseq
        %v511 = vshrl.u32 %v510, 7
        %v512 = vsub.s32 %v509, %v511
        %v513 = vrot.slane %v234, %v512
        %v515 = vunpack.c.l.s4 1983009808
        %v516 = vunpack.c.0.s8 %v515
        %v517 = vlaneseq
        %v518 = vshrl.u32 %v517, 7
        %v519 = vsub.s32 %v516, %v518
        %v520 = vrot.slane %v506, %v519
        %v521 = vcombine.high %v513, %v513
        %v522 = vcombine.high %v520, %v520
        %v523 = vcombine.high %v235, %v235
        %v525 = vunpack.c.l.s4 1983009808
        %v526 = vunpack.c.0.s8 %v525
        %v527 = vlaneseq
        %v528 = vshrl.u32 %v527, 7
        %v529 = vsub.s32 %v526, %v528
        %v530 = vrot.slane %v235, %v529
        %v532 = vunpack.c.l.s4 1983009808
        %v533 = vunpack.c.0.s8 %v532
        %v534 = vlaneseq
        %v535 = vshrl.u32 %v534, 7
        %v536 = vsub.s32 %v533, %v535
        %v537 = vrot.slane %v523, %v536
        %v538 = vcombine.high %v530, %v530
        %v539 = vcombine.high %v537, %v537
        %v540 = vcombine.high %v236, %v236
        %v542 = vunpack.c.l.s4 1983009808
        %v543 = vunpack.c.0.s8 %v542
        %v544 = vlaneseq
        %v545 = vshrl.u32 %v544, 7
        %v546 = vsub.s32 %v543, %v545
        %v547 = vrot.slane %v236, %v546
        %v549 = vunpack.c.l.s4 1983009808
        %v550 = vunpack.c.0.s8 %v549
        %v551 = vlaneseq
        %v552 = vshrl.u32 %v551, 7
        %v553 = vsub.s32 %v550, %v552
        %v554 = vrot.slane %v540, %v553
        %v555 = vcombine.high %v547, %v547
        %v556 = vcombine.high %v554, %v554
        %v557 = vcombine.high %v237, %v237
        %v559 = vunpack.c.l.s4 1983009808
        %v560 = vunpack.c.0.s8 %v559
        %v561 = vlaneseq
        %v562 = vshrl.u32 %v561, 7
        %v563 = vsub.s32 %v560, %v562
        %v564 = vrot.slane %v237, %v563
        %v566 = vunpack.c.l.s4 1983009808
        %v567 = vunpack.c.0.s8 %v566
        %v568 = vlaneseq
        %v569 = vshrl.u32 %v568, 7
        %v570 = vsub.s32 %v567, %v569
        %v571 = vrot.slane %v557, %v570
        %v572 = vcombine.high %v564, %v564
        %v573 = vcombine.high %v571, %v571
        %v574 = vcombine.high %v238, %v238
        %v576 = vunpack.c.l.s4 1983009808
        %v577 = vunpack.c.0.s8 %v576
        %v578 = vlaneseq
        %v579 = vshrl.u32 %v578, 7
        %v580 = vsub.s32 %v577, %v579
        %v581 = vrot.slane %v238, %v580
        %v583 = vunpack.c.l.s4 1983009808
        %v584 = vunpack.c.0.s8 %v583
        %v585 = vlaneseq
        %v586 = vshrl.u32 %v585, 7
        %v587 = vsub.s32 %v584, %v586
        %v588 = vrot.slane %v574, %v587
        %v589 = vcombine.high %v581, %v581
        %v590 = vcombine.high %v588, %v588
        %v591 = vcombine.high %v239, %v239
        %v593 = vunpack.c.l.s4 1983009808
        %v594 = vunpack.c.0.s8 %v593
        %v595 = vlaneseq
        %v596 = vshrl.u32 %v595, 7
        %v597 = vsub.s32 %v594, %v596
        %v598 = vrot.slane %v239, %v597
        %v600 = vunpack.c.l.s4 1983009808
        %v601 = vunpack.c.0.s8 %v600
        %v602 = vlaneseq
        %v603 = vshrl.u32 %v602, 7
        %v604 = vsub.s32 %v601, %v603
        %v605 = vrot.slane %v591, %v604
        %v606 = vcombine.high %v598, %v598
        %v607 = vcombine.high %v605, %v605
        %v608 = vcombine.high %v240, %v240
        %v610 = vunpack.c.l.s4 1983009808
        %v611 = vunpack.c.0.s8 %v610
        %v612 = vlaneseq
        %v613 = vshrl.u32 %v612, 7
        %v614 = vsub.s32 %v611, %v613
        %v615 = vrot.slane %v240, %v614
        %v617 = vunpack.c.l.s4 1983009808
        %v618 = vunpack.c.0.s8 %v617
        %v619 = vlaneseq
        %v620 = vshrl.u32 %v619, 7
        %v621 = vsub.s32 %v618, %v620
        %v622 = vrot.slane %v608, %v621
        %v623 = vcombine.high %v615, %v615
        %v624 = vcombine.high %v622, %v622
        %v625 = vcombine.high %v241, %v241
        %v627 = vunpack.c.l.s4 1983009808
        %v628 = vunpack.c.0.s8 %v627
        %v629 = vlaneseq
        %v630 = vshrl.u32 %v629, 7
        %v631 = vsub.s32 %v628, %v630
        %v632 = vrot.slane %v241, %v631
        %v634 = vunpack.c.l.s4 1983009808
        %v635 = vunpack.c.0.s8 %v634
        %v636 = vlaneseq
        %v637 = vshrl.u32 %v636, 7
        %v638 = vsub.s32 %v635, %v637
        %v639 = vrot.slane %v625, %v638
        %v640 = vcombine.high %v632, %v632
        %v641 = vcombine.high %v639, %v639
        %v642 = vcombine.high %v242, %v242
        %v644 = vunpack.c.l.s4 1983009808
        %v645 = vunpack.c.0.s8 %v644
        %v646 = vlaneseq
        %v647 = vshrl.u32 %v646, 7
        %v648 = vsub.s32 %v645, %v647
        %v649 = vrot.slane %v242, %v648
        %v651 = vunpack.c.l.s4 1983009808
        %v652 = vunpack.c.0.s8 %v651
        %v653 = vlaneseq
        %v654 = vshrl.u32 %v653, 7
        %v655 = vsub.s32 %v652, %v654
        %v656 = vrot.slane %v642, %v655
        %v657 = vcombine.high %v649, %v649
        %v658 = vcombine.high %v656, %v656
        %v659 = vcombine.high %v243, %v243
        %v661 = vunpack.c.l.s4 1983009808
        %v662 = vunpack.c.0.s8 %v661
        %v663 = vlaneseq
        %v664 = vshrl.u32 %v663, 7
        %v665 = vsub.s32 %v662, %v664
        %v666 = vrot.slane %v243, %v665
        %v668 = vunpack.c.l.s4 1983009808
        %v669 = vunpack.c.0.s8 %v668
        %v670 = vlaneseq
        %v671 = vshrl.u32 %v670, 7
        %v672 = vsub.s32 %v669, %v671
        %v673 = vrot.slane %v659, %v672
        %v674 = vcombine.high %v666, %v666
        %v675 = vcombine.high %v673, %v673
        %v676 = vcombine.high %v244, %v244
        %v678 = vunpack.c.l.s4 1983009808
        %v679 = vunpack.c.0.s8 %v678
        %v680 = vlaneseq
        %v681 = vshrl.u32 %v680, 7
        %v682 = vsub.s32 %v679, %v681
        %v683 = vrot.slane %v244, %v682
        %v685 = vunpack.c.l.s4 1983009808
        %v686 = vunpack.c.0.s8 %v685
        %v687 = vlaneseq
        %v688 = vshrl.u32 %v687, 7
        %v689 = vsub.s32 %v686, %v688
        %v690 = vrot.slane %v676, %v689
        %v691 = vcombine.high %v683, %v683
        %v692 = vcombine.high %v690, %v690
        %v693 = vcombine.high %v245, %v245
        %v695 = vunpack.c.l.s4 1983009808
        %v696 = vunpack.c.0.s8 %v695
        %v697 = vlaneseq
        %v698 = vshrl.u32 %v697, 7
        %v699 = vsub.s32 %v696, %v698
        %v700 = vrot.slane %v245, %v699
        %v702 = vunpack.c.l.s4 1983009808
        %v703 = vunpack.c.0.s8 %v702
        %v704 = vlaneseq
        %v705 = vshrl.u32 %v704, 7
        %v706 = vsub.s32 %v703, %v705
        %v707 = vrot.slane %v693, %v706
        %v708 = vcombine.high %v700, %v700
        %v709 = vcombine.high %v707, %v707
        %v710 = vcombine.high %v246, %v246
        %v712 = vunpack.c.l.s4 1983009808
        %v713 = vunpack.c.0.s8 %v712
        %v714 = vlaneseq
        %v715 = vshrl.u32 %v714, 7
        %v716 = vsub.s32 %v713, %v715
        %v717 = vrot.slane %v246, %v716
        %v719 = vunpack.c.l.s4 1983009808
        %v720 = vunpack.c.0.s8 %v719
        %v721 = vlaneseq
        %v722 = vshrl.u32 %v721, 7
        %v723 = vsub.s32 %v720, %v722
        %v724 = vrot.slane %v710, %v723
        %v725 = vcombine.high %v717, %v717
        %v726 = vcombine.high %v724, %v724
        %v727 = vcombine.high %v247, %v247
        %v729 = vunpack.c.l.s4 1983009808
        %v730 = vunpack.c.0.s8 %v729
        %v731 = vlaneseq
        %v732 = vshrl.u32 %v731, 7
        %v733 = vsub.s32 %v730, %v732
        %v734 = vrot.slane %v247, %v733
        %v736 = vunpack.c.l.s4 1983009808
        %v737 = vunpack.c.0.s8 %v736
        %v738 = vlaneseq
        %v739 = vshrl.u32 %v738, 7
        %v740 = vsub.s32 %v737, %v739
        %v741 = vrot.slane %v727, %v740
        %v742 = vcombine.high %v734, %v734
        %v743 = vcombine.high %v741, %v741
        %v744 = vcombine.high %v248, %v248
        %v746 = vunpack.c.l.s4 1983009808
        %v747 = vunpack.c.0.s8 %v746
        %v748 = vlaneseq
        %v749 = vshrl.u32 %v748, 7
        %v750 = vsub.s32 %v747, %v749
        %v751 = vrot.slane %v248, %v750
        %v753 = vunpack.c.l.s4 1983009808
        %v754 = vunpack.c.0.s8 %v753
        %v755 = vlaneseq
        %v756 = vshrl.u32 %v755, 7
        %v757 = vsub.s32 %v754, %v756
        %v758 = vrot.slane %v744, %v757
        %v759 = vcombine.high %v751, %v751
        %v760 = vcombine.high %v758, %v758
        %v761 = vcombine.high %v249, %v249
        %v763 = vunpack.c.l.s4 1983009808
        %v764 = vunpack.c.0.s8 %v763
        %v765 = vlaneseq
        %v766 = vshrl.u32 %v765, 7
        %v767 = vsub.s32 %v764, %v766
        %v768 = vrot.slane %v249, %v767
        %v770 = vunpack.c.l.s4 1983009808
        %v771 = vunpack.c.0.s8 %v770
        %v772 = vlaneseq
        %v773 = vshrl.u32 %v772, 7
        %v774 = vsub.s32 %v771, %v773
        %v775 = vrot.slane %v761, %v774
        %v776 = vcombine.high %v768, %v768
        %v777 = vcombine.high %v775, %v775
        %v778 = vcombine.high %v250, %v250
        %v780 = vunpack.c.l.s4 1983009808
        %v781 = vunpack.c.0.s8 %v780
        %v782 = vlaneseq
        %v783 = vshrl.u32 %v782, 7
        %v784 = vsub.s32 %v781, %v783
        %v785 = vrot.slane %v250, %v784
        %v787 = vunpack.c.l.s4 1983009808
        %v788 = vunpack.c.0.s8 %v787
        %v789 = vlaneseq
        %v790 = vshrl.u32 %v789, 7
        %v791 = vsub.s32 %v788, %v790
        %v792 = vrot.slane %v778, %v791
        %v793 = vcombine.high %v785, %v785
        %v794 = vcombine.high %v792, %v792
        %v795 = vcombine.high %v251, %v251
        %v797 = vunpack.c.l.s4 1983009808
        %v798 = vunpack.c.0.s8 %v797
        %v799 = vlaneseq
        %v800 = vshrl.u32 %v799, 7
        %v801 = vsub.s32 %v798, %v800
        %v802 = vrot.slane %v251, %v801
        %v804 = vunpack.c.l.s4 1983009808
        %v805 = vunpack.c.0.s8 %v804
        %v806 = vlaneseq
        %v807 = vshrl.u32 %v806, 7
        %v808 = vsub.s32 %v805, %v807
        %v809 = vrot.slane %v795, %v808
        %v810 = vcombine.high %v802, %v802
        %v811 = vcombine.high %v809, %v809
        %v812 = vcombine.high %v252, %v252
        %v814 = vunpack.c.l.s4 1983009808
        %v815 = vunpack.c.0.s8 %v814
        %v816 = vlaneseq
        %v817 = vshrl.u32 %v816, 7
        %v818 = vsub.s32 %v815, %v817
        %v819 = vrot.slane %v252, %v818
        %v821 = vunpack.c.l.s4 1983009808
        %v822 = vunpack.c.0.s8 %v821
        %v823 = vlaneseq
        %v824 = vshrl.u32 %v823, 7
        %v825 = vsub.s32 %v822, %v824
        %v826 = vrot.slane %v812, %v825
        %v827 = vcombine.high %v819, %v819
        %v828 = vcombine.high %v826, %v826
        %vm957 = vcmask 25600
        %v958 = vsel %vm957, %v292, -inf
        %v959 = vrot.slane %v958, 4
        %v960 = vmax.f32 %v958, %v959
        %v961 = vrot.slane %v960, 2
        %v962 = vmax.f32 %v960, %v961
        %v963 = vrot.slane %v962, 1
        %v964 = vmax.f32 %v962, %v963
        %v965 = vsel %vm957, %v300, -inf
        %v966 = vrot.slane %v965, 4
        %v967 = vmax.f32 %v965, %v966
        %v968 = vrot.slane %v967, 2
        %v969 = vmax.f32 %v967, %v968
        %v970 = vrot.slane %v969, 1
        %v971 = vmax.f32 %v969, %v970
        %v972 = vsel %vm957, %v299, -inf
        %v973 = vrot.slane %v972, 4
        %v974 = vmax.f32 %v972, %v973
        %v975 = vrot.slane %v974, 2
        %v976 = vmax.f32 %v974, %v975
        %v977 = vrot.slane %v976, 1
        %v978 = vmax.f32 %v976, %v977
        %v979 = vsel %vm957, %v301, -inf
        %v980 = vrot.slane %v979, 4
        %v981 = vmax.f32 %v979, %v980
        %v982 = vrot.slane %v981, 2
        %v983 = vmax.f32 %v981, %v982
        %v984 = vrot.slane %v983, 1
        %v985 = vmax.f32 %v983, %v984
        %v986 = vsel %vm957, %v309, -inf
        %v987 = vrot.slane %v986, 4
        %v988 = vmax.f32 %v986, %v987
        %v989 = vrot.slane %v988, 2
        %v990 = vmax.f32 %v988, %v989
        %v991 = vrot.slane %v990, 1
        %v992 = vmax.f32 %v990, %v991
        %v993 = vsel %vm957, %v317, -inf
        %v994 = vrot.slane %v993, 4
        %v995 = vmax.f32 %v993, %v994
        %v996 = vrot.slane %v995, 2
        %v997 = vmax.f32 %v995, %v996
        %v998 = vrot.slane %v997, 1
        %v999 = vmax.f32 %v997, %v998
        %v1000 = vsel %vm957, %v316, -inf
        %v1001 = vrot.slane %v1000, 4
        %v1002 = vmax.f32 %v1000, %v1001
        %v1003 = vrot.slane %v1002, 2
        %v1004 = vmax.f32 %v1002, %v1003
        %v1005 = vrot.slane %v1004, 1
        %v1006 = vmax.f32 %v1004, %v1005
        %v1007 = vsel %vm957, %v318, -inf
        %v1008 = vrot.slane %v1007, 4
        %v1009 = vmax.f32 %v1007, %v1008
        %v1010 = vrot.slane %v1009, 2
        %v1011 = vmax.f32 %v1009, %v1010
        %v1012 = vrot.slane %v1011, 1
        %v1013 = vmax.f32 %v1011, %v1012
        %v1014 = vsel %vm957, %v326, -inf
        %v1015 = vrot.slane %v1014, 4
        %v1016 = vmax.f32 %v1014, %v1015
        %v1017 = vrot.slane %v1016, 2
        %v1018 = vmax.f32 %v1016, %v1017
        %v1019 = vrot.slane %v1018, 1
        %v1020 = vmax.f32 %v1018, %v1019
        %v1021 = vsel %vm957, %v334, -inf
        %v1022 = vrot.slane %v1021, 4
        %v1023 = vmax.f32 %v1021, %v1022
        %v1024 = vrot.slane %v1023, 2
        %v1025 = vmax.f32 %v1023, %v1024
        %v1026 = vrot.slane %v1025, 1
        %v1027 = vmax.f32 %v1025, %v1026
        %v1028 = vsel %vm957, %v333, -inf
        %v1029 = vrot.slane %v1028, 4
        %v1030 = vmax.f32 %v1028, %v1029
        %v1031 = vrot.slane %v1030, 2
        %v1032 = vmax.f32 %v1030, %v1031
        %v1033 = vrot.slane %v1032, 1
        %v1034 = vmax.f32 %v1032, %v1033
        %v1035 = vsel %vm957, %v335, -inf
        %v1036 = vrot.slane %v1035, 4
        %v1037 = vmax.f32 %v1035, %v1036
        %v1038 = vrot.slane %v1037, 2
        %v1039 = vmax.f32 %v1037, %v1038
        %v1040 = vrot.slane %v1039, 1
        %v1041 = vmax.f32 %v1039, %v1040
        %v1042 = vsel %vm957, %v343, -inf
        %v1043 = vrot.slane %v1042, 4
        %v1044 = vmax.f32 %v1042, %v1043
        %v1045 = vrot.slane %v1044, 2
        %v1046 = vmax.f32 %v1044, %v1045
        %v1047 = vrot.slane %v1046, 1
        %v1048 = vmax.f32 %v1046, %v1047
        %v1049 = vsel %vm957, %v351, -inf
        %v1050 = vrot.slane %v1049, 4
        %v1051 = vmax.f32 %v1049, %v1050
        %v1052 = vrot.slane %v1051, 2
        %v1053 = vmax.f32 %v1051, %v1052
        %v1054 = vrot.slane %v1053, 1
        %v1055 = vmax.f32 %v1053, %v1054
        %v1056 = vsel %vm957, %v350, -inf
        %v1057 = vrot.slane %v1056, 4
        %v1058 = vmax.f32 %v1056, %v1057
        %v1059 = vrot.slane %v1058, 2
        %v1060 = vmax.f32 %v1058, %v1059
        %v1061 = vrot.slane %v1060, 1
        %v1062 = vmax.f32 %v1060, %v1061
        %v1063 = vsel %vm957, %v352, -inf
        %v1064 = vrot.slane %v1063, 4
        %v1065 = vmax.f32 %v1063, %v1064
        %v1066 = vrot.slane %v1065, 2
        %v1067 = vmax.f32 %v1065, %v1066
        %v1068 = vrot.slane %v1067, 1
        %v1069 = vmax.f32 %v1067, %v1068
        %v1070 = vsel %vm957, %v360, -inf
        %v1071 = vrot.slane %v1070, 4
        %v1072 = vmax.f32 %v1070, %v1071
        %v1073 = vrot.slane %v1072, 2
        %v1074 = vmax.f32 %v1072, %v1073
        %v1075 = vrot.slane %v1074, 1
        %v1076 = vmax.f32 %v1074, %v1075
        %v1077 = vsel %vm957, %v368, -inf
        %v1078 = vrot.slane %v1077, 4
        %v1079 = vmax.f32 %v1077, %v1078
        %v1080 = vrot.slane %v1079, 2
        %v1081 = vmax.f32 %v1079, %v1080
        %v1082 = vrot.slane %v1081, 1
        %v1083 = vmax.f32 %v1081, %v1082
        %v1084 = vsel %vm957, %v367, -inf
        %v1085 = vrot.slane %v1084, 4
        %v1086 = vmax.f32 %v1084, %v1085
        %v1087 = vrot.slane %v1086, 2
        %v1088 = vmax.f32 %v1086, %v1087
        %v1089 = vrot.slane %v1088, 1
        %v1090 = vmax.f32 %v1088, %v1089
        %v1091 = vsel %vm957, %v369, -inf
        %v1092 = vrot.slane %v1091, 4
        %v1093 = vmax.f32 %v1091, %v1092
        %v1094 = vrot.slane %v1093, 2
        %v1095 = vmax.f32 %v1093, %v1094
        %v1096 = vrot.slane %v1095, 1
        %v1097 = vmax.f32 %v1095, %v1096
        %v1098 = vsel %vm957, %v377, -inf
        %v1099 = vrot.slane %v1098, 4
        %v1100 = vmax.f32 %v1098, %v1099
        %v1101 = vrot.slane %v1100, 2
        %v1102 = vmax.f32 %v1100, %v1101
        %v1103 = vrot.slane %v1102, 1
        %v1104 = vmax.f32 %v1102, %v1103
        %v1105 = vsel %vm957, %v385, -inf
        %v1106 = vrot.slane %v1105, 4
        %v1107 = vmax.f32 %v1105, %v1106
        %v1108 = vrot.slane %v1107, 2
        %v1109 = vmax.f32 %v1107, %v1108
        %v1110 = vrot.slane %v1109, 1
        %v1111 = vmax.f32 %v1109, %v1110
        %v1112 = vsel %vm957, %v384, -inf
        %v1113 = vrot.slane %v1112, 4
        %v1114 = vmax.f32 %v1112, %v1113
        %v1115 = vrot.slane %v1114, 2
        %v1116 = vmax.f32 %v1114, %v1115
        %v1117 = vrot.slane %v1116, 1
        %v1118 = vmax.f32 %v1116, %v1117
        %v1119 = vsel %vm957, %v386, -inf
        %v1120 = vrot.slane %v1119, 4
        %v1121 = vmax.f32 %v1119, %v1120
        %v1122 = vrot.slane %v1121, 2
        %v1123 = vmax.f32 %v1121, %v1122
        %v1124 = vrot.slane %v1123, 1
        %v1125 = vmax.f32 %v1123, %v1124
        %v1126 = vsel %vm957, %v394, -inf
        %v1127 = vrot.slane %v1126, 4
        %v1128 = vmax.f32 %v1126, %v1127
        %v1129 = vrot.slane %v1128, 2
        %v1130 = vmax.f32 %v1128, %v1129
        %v1131 = vrot.slane %v1130, 1
        %v1132 = vmax.f32 %v1130, %v1131
        %v1133 = vsel %vm957, %v402, -inf
        %v1134 = vrot.slane %v1133, 4
        %v1135 = vmax.f32 %v1133, %v1134
        %v1136 = vrot.slane %v1135, 2
        %v1137 = vmax.f32 %v1135, %v1136
        %v1138 = vrot.slane %v1137, 1
        %v1139 = vmax.f32 %v1137, %v1138
        %v1140 = vsel %vm957, %v401, -inf
        %v1141 = vrot.slane %v1140, 4
        %v1142 = vmax.f32 %v1140, %v1141
        %v1143 = vrot.slane %v1142, 2
        %v1144 = vmax.f32 %v1142, %v1143
        %v1145 = vrot.slane %v1144, 1
        %v1146 = vmax.f32 %v1144, %v1145
        %v1147 = vsel %vm957, %v403, -inf
        %v1148 = vrot.slane %v1147, 4
        %v1149 = vmax.f32 %v1147, %v1148
        %v1150 = vrot.slane %v1149, 2
        %v1151 = vmax.f32 %v1149, %v1150
        %v1152 = vrot.slane %v1151, 1
        %v1153 = vmax.f32 %v1151, %v1152
        %v1154 = vsel %vm957, %v411, -inf
        %v1155 = vrot.slane %v1154, 4
        %v1156 = vmax.f32 %v1154, %v1155
        %v1157 = vrot.slane %v1156, 2
        %v1158 = vmax.f32 %v1156, %v1157
        %v1159 = vrot.slane %v1158, 1
        %v1160 = vmax.f32 %v1158, %v1159
        %v1161 = vsel %vm957, %v419, -inf
        %v1162 = vrot.slane %v1161, 4
        %v1163 = vmax.f32 %v1161, %v1162
        %v1164 = vrot.slane %v1163, 2
        %v1165 = vmax.f32 %v1163, %v1164
        %v1166 = vrot.slane %v1165, 1
        %v1167 = vmax.f32 %v1165, %v1166
        %v1168 = vsel %vm957, %v418, -inf
        %v1169 = vrot.slane %v1168, 4
        %v1170 = vmax.f32 %v1168, %v1169
        %v1171 = vrot.slane %v1170, 2
        %v1172 = vmax.f32 %v1170, %v1171
        %v1173 = vrot.slane %v1172, 1
        %v1174 = vmax.f32 %v1172, %v1173
        %v1175 = vsel %vm957, %v420, -inf
        %v1176 = vrot.slane %v1175, 4
        %v1177 = vmax.f32 %v1175, %v1176
        %v1178 = vrot.slane %v1177, 2
        %v1179 = vmax.f32 %v1177, %v1178
        %v1180 = vrot.slane %v1179, 1
        %v1181 = vmax.f32 %v1179, %v1180
        %v1182 = vsel %vm957, %v428, -inf
        %v1183 = vrot.slane %v1182, 4
        %v1184 = vmax.f32 %v1182, %v1183
        %v1185 = vrot.slane %v1184, 2
        %v1186 = vmax.f32 %v1184, %v1185
        %v1187 = vrot.slane %v1186, 1
        %v1188 = vmax.f32 %v1186, %v1187
        %v1189 = vsel %vm957, %v436, -inf
        %v1190 = vrot.slane %v1189, 4
        %v1191 = vmax.f32 %v1189, %v1190
        %v1192 = vrot.slane %v1191, 2
        %v1193 = vmax.f32 %v1191, %v1192
        %v1194 = vrot.slane %v1193, 1
        %v1195 = vmax.f32 %v1193, %v1194
        %v1196 = vsel %vm957, %v435, -inf
        %v1197 = vrot.slane %v1196, 4
        %v1198 = vmax.f32 %v1196, %v1197
        %v1199 = vrot.slane %v1198, 2
        %v1200 = vmax.f32 %v1198, %v1199
        %v1201 = vrot.slane %v1200, 1
        %v1202 = vmax.f32 %v1200, %v1201
        %v1203 = vsel %vm957, %v437, -inf
        %v1204 = vrot.slane %v1203, 4
        %v1205 = vmax.f32 %v1203, %v1204
        %v1206 = vrot.slane %v1205, 2
        %v1207 = vmax.f32 %v1205, %v1206
        %v1208 = vrot.slane %v1207, 1
        %v1209 = vmax.f32 %v1207, %v1208
        %v1210 = vsel %vm957, %v445, -inf
        %v1211 = vrot.slane %v1210, 4
        %v1212 = vmax.f32 %v1210, %v1211
        %v1213 = vrot.slane %v1212, 2
        %v1214 = vmax.f32 %v1212, %v1213
        %v1215 = vrot.slane %v1214, 1
        %v1216 = vmax.f32 %v1214, %v1215
        %v1217 = vsel %vm957, %v453, -inf
        %v1218 = vrot.slane %v1217, 4
        %v1219 = vmax.f32 %v1217, %v1218
        %v1220 = vrot.slane %v1219, 2
        %v1221 = vmax.f32 %v1219, %v1220
        %v1222 = vrot.slane %v1221, 1
        %v1223 = vmax.f32 %v1221, %v1222
        %v1224 = vsel %vm957, %v452, -inf
        %v1225 = vrot.slane %v1224, 4
        %v1226 = vmax.f32 %v1224, %v1225
        %v1227 = vrot.slane %v1226, 2
        %v1228 = vmax.f32 %v1226, %v1227
        %v1229 = vrot.slane %v1228, 1
        %v1230 = vmax.f32 %v1228, %v1229
        %v1231 = vsel %vm957, %v454, -inf
        %v1232 = vrot.slane %v1231, 4
        %v1233 = vmax.f32 %v1231, %v1232
        %v1234 = vrot.slane %v1233, 2
        %v1235 = vmax.f32 %v1233, %v1234
        %v1236 = vrot.slane %v1235, 1
        %v1237 = vmax.f32 %v1235, %v1236
        %v1238 = vsel %vm957, %v462, -inf
        %v1239 = vrot.slane %v1238, 4
        %v1240 = vmax.f32 %v1238, %v1239
        %v1241 = vrot.slane %v1240, 2
        %v1242 = vmax.f32 %v1240, %v1241
        %v1243 = vrot.slane %v1242, 1
        %v1244 = vmax.f32 %v1242, %v1243
        %v1245 = vsel %vm957, %v470, -inf
        %v1246 = vrot.slane %v1245, 4
        %v1247 = vmax.f32 %v1245, %v1246
        %v1248 = vrot.slane %v1247, 2
        %v1249 = vmax.f32 %v1247, %v1248
        %v1250 = vrot.slane %v1249, 1
        %v1251 = vmax.f32 %v1249, %v1250
        %v1252 = vsel %vm957, %v469, -inf
        %v1253 = vrot.slane %v1252, 4
        %v1254 = vmax.f32 %v1252, %v1253
        %v1255 = vrot.slane %v1254, 2
        %v1256 = vmax.f32 %v1254, %v1255
        %v1257 = vrot.slane %v1256, 1
        %v1258 = vmax.f32 %v1256, %v1257
        %v1259 = vsel %vm957, %v471, -inf
        %v1260 = vrot.slane %v1259, 4
        %v1261 = vmax.f32 %v1259, %v1260
        %v1262 = vrot.slane %v1261, 2
        %v1263 = vmax.f32 %v1261, %v1262
        %v1264 = vrot.slane %v1263, 1
        %v1265 = vmax.f32 %v1263, %v1264
        %v1266 = vsel %vm957, %v479, -inf
        %v1267 = vrot.slane %v1266, 4
        %v1268 = vmax.f32 %v1266, %v1267
        %v1269 = vrot.slane %v1268, 2
        %v1270 = vmax.f32 %v1268, %v1269
        %v1271 = vrot.slane %v1270, 1
        %v1272 = vmax.f32 %v1270, %v1271
        %v1273 = vsel %vm957, %v487, -inf
        %v1274 = vrot.slane %v1273, 4
        %v1275 = vmax.f32 %v1273, %v1274
        %v1276 = vrot.slane %v1275, 2
        %v1277 = vmax.f32 %v1275, %v1276
        %v1278 = vrot.slane %v1277, 1
        %v1279 = vmax.f32 %v1277, %v1278
        %v1280 = vsel %vm957, %v486, -inf
        %v1281 = vrot.slane %v1280, 4
        %v1282 = vmax.f32 %v1280, %v1281
        %v1283 = vrot.slane %v1282, 2
        %v1284 = vmax.f32 %v1282, %v1283
        %v1285 = vrot.slane %v1284, 1
        %v1286 = vmax.f32 %v1284, %v1285
        %v1287 = vsel %vm957, %v488, -inf
        %v1288 = vrot.slane %v1287, 4
        %v1289 = vmax.f32 %v1287, %v1288
        %v1290 = vrot.slane %v1289, 2
        %v1291 = vmax.f32 %v1289, %v1290
        %v1292 = vrot.slane %v1291, 1
        %v1293 = vmax.f32 %v1291, %v1292
        %v1294 = vsel %vm957, %v496, -inf
        %v1295 = vrot.slane %v1294, 4
        %v1296 = vmax.f32 %v1294, %v1295
        %v1297 = vrot.slane %v1296, 2
        %v1298 = vmax.f32 %v1296, %v1297
        %v1299 = vrot.slane %v1298, 1
        %v1300 = vmax.f32 %v1298, %v1299
        %v1301 = vsel %vm957, %v504, -inf
        %v1302 = vrot.slane %v1301, 4
        %v1303 = vmax.f32 %v1301, %v1302
        %v1304 = vrot.slane %v1303, 2
        %v1305 = vmax.f32 %v1303, %v1304
        %v1306 = vrot.slane %v1305, 1
        %v1307 = vmax.f32 %v1305, %v1306
        %v1308 = vsel %vm957, %v503, -inf
        %v1309 = vrot.slane %v1308, 4
        %v1310 = vmax.f32 %v1308, %v1309
        %v1311 = vrot.slane %v1310, 2
        %v1312 = vmax.f32 %v1310, %v1311
        %v1313 = vrot.slane %v1312, 1
        %v1314 = vmax.f32 %v1312, %v1313
        %v1315 = vsel %vm957, %v505, -inf
        %v1316 = vrot.slane %v1315, 4
        %v1317 = vmax.f32 %v1315, %v1316
        %v1318 = vrot.slane %v1317, 2
        %v1319 = vmax.f32 %v1317, %v1318
        %v1320 = vrot.slane %v1319, 1
        %v1321 = vmax.f32 %v1319, %v1320
        %v1322 = vsel %vm957, %v513, -inf
        %v1323 = vrot.slane %v1322, 4
        %v1324 = vmax.f32 %v1322, %v1323
        %v1325 = vrot.slane %v1324, 2
        %v1326 = vmax.f32 %v1324, %v1325
        %v1327 = vrot.slane %v1326, 1
        %v1328 = vmax.f32 %v1326, %v1327
        %v1329 = vsel %vm957, %v521, -inf
        %v1330 = vrot.slane %v1329, 4
        %v1331 = vmax.f32 %v1329, %v1330
        %v1332 = vrot.slane %v1331, 2
        %v1333 = vmax.f32 %v1331, %v1332
        %v1334 = vrot.slane %v1333, 1
        %v1335 = vmax.f32 %v1333, %v1334
        %v1336 = vsel %vm957, %v520, -inf
        %v1337 = vrot.slane %v1336, 4
        %v1338 = vmax.f32 %v1336, %v1337
        %v1339 = vrot.slane %v1338, 2
        %v1340 = vmax.f32 %v1338, %v1339
        %v1341 = vrot.slane %v1340, 1
        %v1342 = vmax.f32 %v1340, %v1341
        %v1343 = vsel %vm957, %v522, -inf
        %v1344 = vrot.slane %v1343, 4
        %v1345 = vmax.f32 %v1343, %v1344
        %v1346 = vrot.slane %v1345, 2
        %v1347 = vmax.f32 %v1345, %v1346
        %v1348 = vrot.slane %v1347, 1
        %v1349 = vmax.f32 %v1347, %v1348
        %v1350 = vsel %vm957, %v530, -inf
        %v1351 = vrot.slane %v1350, 4
        %v1352 = vmax.f32 %v1350, %v1351
        %v1353 = vrot.slane %v1352, 2
        %v1354 = vmax.f32 %v1352, %v1353
        %v1355 = vrot.slane %v1354, 1
        %v1356 = vmax.f32 %v1354, %v1355
        %v1357 = vsel %vm957, %v538, -inf
        %v1358 = vrot.slane %v1357, 4
        %v1359 = vmax.f32 %v1357, %v1358
        %v1360 = vrot.slane %v1359, 2
        %v1361 = vmax.f32 %v1359, %v1360
        %v1362 = vrot.slane %v1361, 1
        %v1363 = vmax.f32 %v1361, %v1362
        %v1364 = vsel %vm957, %v537, -inf
        %v1365 = vrot.slane %v1364, 4
        %v1366 = vmax.f32 %v1364, %v1365
        %v1367 = vrot.slane %v1366, 2
        %v1368 = vmax.f32 %v1366, %v1367
        %v1369 = vrot.slane %v1368, 1
        %v1370 = vmax.f32 %v1368, %v1369
        %v1371 = vsel %vm957, %v539, -inf
        %v1372 = vrot.slane %v1371, 4
        %v1373 = vmax.f32 %v1371, %v1372
        %v1374 = vrot.slane %v1373, 2
        %v1375 = vmax.f32 %v1373, %v1374
        %v1376 = vrot.slane %v1375, 1
        %v1377 = vmax.f32 %v1375, %v1376
        %v1378 = vsel %vm957, %v547, -inf
        %v1379 = vrot.slane %v1378, 4
        %v1380 = vmax.f32 %v1378, %v1379
        %v1381 = vrot.slane %v1380, 2
        %v1382 = vmax.f32 %v1380, %v1381
        %v1383 = vrot.slane %v1382, 1
        %v1384 = vmax.f32 %v1382, %v1383
        %v1385 = vsel %vm957, %v555, -inf
        %v1386 = vrot.slane %v1385, 4
        %v1387 = vmax.f32 %v1385, %v1386
        %v1388 = vrot.slane %v1387, 2
        %v1389 = vmax.f32 %v1387, %v1388
        %v1390 = vrot.slane %v1389, 1
        %v1391 = vmax.f32 %v1389, %v1390
        %v1392 = vsel %vm957, %v554, -inf
        %v1393 = vrot.slane %v1392, 4
        %v1394 = vmax.f32 %v1392, %v1393
        %v1395 = vrot.slane %v1394, 2
        %v1396 = vmax.f32 %v1394, %v1395
        %v1397 = vrot.slane %v1396, 1
        %v1398 = vmax.f32 %v1396, %v1397
        %v1399 = vsel %vm957, %v556, -inf
        %v1400 = vrot.slane %v1399, 4
        %v1401 = vmax.f32 %v1399, %v1400
        %v1402 = vrot.slane %v1401, 2
        %v1403 = vmax.f32 %v1401, %v1402
        %v1404 = vrot.slane %v1403, 1
        %v1405 = vmax.f32 %v1403, %v1404
        %v1406 = vsel %vm957, %v564, -inf
        %v1407 = vrot.slane %v1406, 4
        %v1408 = vmax.f32 %v1406, %v1407
        %v1409 = vrot.slane %v1408, 2
        %v1410 = vmax.f32 %v1408, %v1409
        %v1411 = vrot.slane %v1410, 1
        %v1412 = vmax.f32 %v1410, %v1411
        %v1413 = vsel %vm957, %v572, -inf
        %v1414 = vrot.slane %v1413, 4
        %v1415 = vmax.f32 %v1413, %v1414
        %v1416 = vrot.slane %v1415, 2
        %v1417 = vmax.f32 %v1415, %v1416
        %v1418 = vrot.slane %v1417, 1
        %v1419 = vmax.f32 %v1417, %v1418
        %v1420 = vsel %vm957, %v571, -inf
        %v1421 = vrot.slane %v1420, 4
        %v1422 = vmax.f32 %v1420, %v1421
        %v1423 = vrot.slane %v1422, 2
        %v1424 = vmax.f32 %v1422, %v1423
        %v1425 = vrot.slane %v1424, 1
        %v1426 = vmax.f32 %v1424, %v1425
        %v1427 = vsel %vm957, %v573, -inf
        %v1428 = vrot.slane %v1427, 4
        %v1429 = vmax.f32 %v1427, %v1428
        %v1430 = vrot.slane %v1429, 2
        %v1431 = vmax.f32 %v1429, %v1430
        %v1432 = vrot.slane %v1431, 1
        %v1433 = vmax.f32 %v1431, %v1432
        %v1434 = vsel %vm957, %v581, -inf
        %v1435 = vrot.slane %v1434, 4
        %v1436 = vmax.f32 %v1434, %v1435
        %v1437 = vrot.slane %v1436, 2
        %v1438 = vmax.f32 %v1436, %v1437
        %v1439 = vrot.slane %v1438, 1
        %v1440 = vmax.f32 %v1438, %v1439
        %v1441 = vsel %vm957, %v589, -inf
        %v1442 = vrot.slane %v1441, 4
        %v1443 = vmax.f32 %v1441, %v1442
        %v1444 = vrot.slane %v1443, 2
        %v1445 = vmax.f32 %v1443, %v1444
        %v1446 = vrot.slane %v1445, 1
        %v1447 = vmax.f32 %v1445, %v1446
        %v1448 = vsel %vm957, %v588, -inf
        %v1449 = vrot.slane %v1448, 4
        %v1450 = vmax.f32 %v1448, %v1449
        %v1451 = vrot.slane %v1450, 2
        %v1452 = vmax.f32 %v1450, %v1451
        %v1453 = vrot.slane %v1452, 1
        %v1454 = vmax.f32 %v1452, %v1453
        %v1455 = vsel %vm957, %v590, -inf
        %v1456 = vrot.slane %v1455, 4
        %v1457 = vmax.f32 %v1455, %v1456
        %v1458 = vrot.slane %v1457, 2
        %v1459 = vmax.f32 %v1457, %v1458
        %v1460 = vrot.slane %v1459, 1
        %v1461 = vmax.f32 %v1459, %v1460
        %v1462 = vsel %vm957, %v598, -inf
        %v1463 = vrot.slane %v1462, 4
        %v1464 = vmax.f32 %v1462, %v1463
        %v1465 = vrot.slane %v1464, 2
        %v1466 = vmax.f32 %v1464, %v1465
        %v1467 = vrot.slane %v1466, 1
        %v1468 = vmax.f32 %v1466, %v1467
        %v1469 = vsel %vm957, %v606, -inf
        %v1470 = vrot.slane %v1469, 4
        %v1471 = vmax.f32 %v1469, %v1470
        %v1472 = vrot.slane %v1471, 2
        %v1473 = vmax.f32 %v1471, %v1472
        %v1474 = vrot.slane %v1473, 1
        %v1475 = vmax.f32 %v1473, %v1474
        %v1476 = vsel %vm957, %v605, -inf
        %v1477 = vrot.slane %v1476, 4
        %v1478 = vmax.f32 %v1476, %v1477
        %v1479 = vrot.slane %v1478, 2
        %v1480 = vmax.f32 %v1478, %v1479
        %v1481 = vrot.slane %v1480, 1
        %v1482 = vmax.f32 %v1480, %v1481
        %v1483 = vsel %vm957, %v607, -inf
        %v1484 = vrot.slane %v1483, 4
        %v1485 = vmax.f32 %v1483, %v1484
        %v1486 = vrot.slane %v1485, 2
        %v1487 = vmax.f32 %v1485, %v1486
        %v1488 = vrot.slane %v1487, 1
        %v1489 = vmax.f32 %v1487, %v1488
        %v1490 = vsel %vm957, %v615, -inf
        %v1491 = vrot.slane %v1490, 4
        %v1492 = vmax.f32 %v1490, %v1491
        %v1493 = vrot.slane %v1492, 2
        %v1494 = vmax.f32 %v1492, %v1493
        %v1495 = vrot.slane %v1494, 1
        %v1496 = vmax.f32 %v1494, %v1495
        %v1497 = vsel %vm957, %v623, -inf
        %v1498 = vrot.slane %v1497, 4
        %v1499 = vmax.f32 %v1497, %v1498
        %v1500 = vrot.slane %v1499, 2
        %v1501 = vmax.f32 %v1499, %v1500
        %v1502 = vrot.slane %v1501, 1
        %v1503 = vmax.f32 %v1501, %v1502
        %v1504 = vsel %vm957, %v622, -inf
        %v1505 = vrot.slane %v1504, 4
        %v1506 = vmax.f32 %v1504, %v1505
        %v1507 = vrot.slane %v1506, 2
        %v1508 = vmax.f32 %v1506, %v1507
        %v1509 = vrot.slane %v1508, 1
        %v1510 = vmax.f32 %v1508, %v1509
        %v1511 = vsel %vm957, %v624, -inf
        %v1512 = vrot.slane %v1511, 4
        %v1513 = vmax.f32 %v1511, %v1512
        %v1514 = vrot.slane %v1513, 2
        %v1515 = vmax.f32 %v1513, %v1514
        %v1516 = vrot.slane %v1515, 1
        %v1517 = vmax.f32 %v1515, %v1516
        %v1518 = vsel %vm957, %v632, -inf
        %v1519 = vrot.slane %v1518, 4
        %v1520 = vmax.f32 %v1518, %v1519
        %v1521 = vrot.slane %v1520, 2
        %v1522 = vmax.f32 %v1520, %v1521
        %v1523 = vrot.slane %v1522, 1
        %v1524 = vmax.f32 %v1522, %v1523
        %v1525 = vsel %vm957, %v640, -inf
        %v1526 = vrot.slane %v1525, 4
        %v1527 = vmax.f32 %v1525, %v1526
        %v1528 = vrot.slane %v1527, 2
        %v1529 = vmax.f32 %v1527, %v1528
        %v1530 = vrot.slane %v1529, 1
        %v1531 = vmax.f32 %v1529, %v1530
        %v1532 = vsel %vm957, %v639, -inf
        %v1533 = vrot.slane %v1532, 4
        %v1534 = vmax.f32 %v1532, %v1533
        %v1535 = vrot.slane %v1534, 2
        %v1536 = vmax.f32 %v1534, %v1535
        %v1537 = vrot.slane %v1536, 1
        %v1538 = vmax.f32 %v1536, %v1537
        %v1539 = vsel %vm957, %v641, -inf
        %v1540 = vrot.slane %v1539, 4
        %v1541 = vmax.f32 %v1539, %v1540
        %v1542 = vrot.slane %v1541, 2
        %v1543 = vmax.f32 %v1541, %v1542
        %v1544 = vrot.slane %v1543, 1
        %v1545 = vmax.f32 %v1543, %v1544
        %v1546 = vsel %vm957, %v649, -inf
        %v1547 = vrot.slane %v1546, 4
        %v1548 = vmax.f32 %v1546, %v1547
        %v1549 = vrot.slane %v1548, 2
        %v1550 = vmax.f32 %v1548, %v1549
        %v1551 = vrot.slane %v1550, 1
        %v1552 = vmax.f32 %v1550, %v1551
        %v1553 = vsel %vm957, %v657, -inf
        %v1554 = vrot.slane %v1553, 4
        %v1555 = vmax.f32 %v1553, %v1554
        %v1556 = vrot.slane %v1555, 2
        %v1557 = vmax.f32 %v1555, %v1556
        %v1558 = vrot.slane %v1557, 1
        %v1559 = vmax.f32 %v1557, %v1558
        %v1560 = vsel %vm957, %v656, -inf
        %v1561 = vrot.slane %v1560, 4
        %v1562 = vmax.f32 %v1560, %v1561
        %v1563 = vrot.slane %v1562, 2
        %v1564 = vmax.f32 %v1562, %v1563
        %v1565 = vrot.slane %v1564, 1
        %v1566 = vmax.f32 %v1564, %v1565
        %v1567 = vsel %vm957, %v658, -inf
        %v1568 = vrot.slane %v1567, 4
        %v1569 = vmax.f32 %v1567, %v1568
        %v1570 = vrot.slane %v1569, 2
        %v1571 = vmax.f32 %v1569, %v1570
        %v1572 = vrot.slane %v1571, 1
        %v1573 = vmax.f32 %v1571, %v1572
        %v1574 = vsel %vm957, %v666, -inf
        %v1575 = vrot.slane %v1574, 4
        %v1576 = vmax.f32 %v1574, %v1575
        %v1577 = vrot.slane %v1576, 2
        %v1578 = vmax.f32 %v1576, %v1577
        %v1579 = vrot.slane %v1578, 1
        %v1580 = vmax.f32 %v1578, %v1579
        %v1581 = vsel %vm957, %v674, -inf
        %v1582 = vrot.slane %v1581, 4
        %v1583 = vmax.f32 %v1581, %v1582
        %v1584 = vrot.slane %v1583, 2
        %v1585 = vmax.f32 %v1583, %v1584
        %v1586 = vrot.slane %v1585, 1
        %v1587 = vmax.f32 %v1585, %v1586
        %v1588 = vsel %vm957, %v673, -inf
        %v1589 = vrot.slane %v1588, 4
        %v1590 = vmax.f32 %v1588, %v1589
        %v1591 = vrot.slane %v1590, 2
        %v1592 = vmax.f32 %v1590, %v1591
        %v1593 = vrot.slane %v1592, 1
        %v1594 = vmax.f32 %v1592, %v1593
        %v1595 = vsel %vm957, %v675, -inf
        %v1596 = vrot.slane %v1595, 4
        %v1597 = vmax.f32 %v1595, %v1596
        %v1598 = vrot.slane %v1597, 2
        %v1599 = vmax.f32 %v1597, %v1598
        %v1600 = vrot.slane %v1599, 1
        %v1601 = vmax.f32 %v1599, %v1600
        %v1602 = vsel %vm957, %v683, -inf
        %v1603 = vrot.slane %v1602, 4
        %v1604 = vmax.f32 %v1602, %v1603
        %v1605 = vrot.slane %v1604, 2
        %v1606 = vmax.f32 %v1604, %v1605
        %v1607 = vrot.slane %v1606, 1
        %v1608 = vmax.f32 %v1606, %v1607
        %v1609 = vsel %vm957, %v691, -inf
        %v1610 = vrot.slane %v1609, 4
        %v1611 = vmax.f32 %v1609, %v1610
        %v1612 = vrot.slane %v1611, 2
        %v1613 = vmax.f32 %v1611, %v1612
        %v1614 = vrot.slane %v1613, 1
        %v1615 = vmax.f32 %v1613, %v1614
        %v1616 = vsel %vm957, %v690, -inf
        %v1617 = vrot.slane %v1616, 4
        %v1618 = vmax.f32 %v1616, %v1617
        %v1619 = vrot.slane %v1618, 2
        %v1620 = vmax.f32 %v1618, %v1619
        %v1621 = vrot.slane %v1620, 1
        %v1622 = vmax.f32 %v1620, %v1621
        %v1623 = vsel %vm957, %v692, -inf
        %v1624 = vrot.slane %v1623, 4
        %v1625 = vmax.f32 %v1623, %v1624
        %v1626 = vrot.slane %v1625, 2
        %v1627 = vmax.f32 %v1625, %v1626
        %v1628 = vrot.slane %v1627, 1
        %v1629 = vmax.f32 %v1627, %v1628
        %v1630 = vsel %vm957, %v700, -inf
        %v1631 = vrot.slane %v1630, 4
        %v1632 = vmax.f32 %v1630, %v1631
        %v1633 = vrot.slane %v1632, 2
        %v1634 = vmax.f32 %v1632, %v1633
        %v1635 = vrot.slane %v1634, 1
        %v1636 = vmax.f32 %v1634, %v1635
        %v1637 = vsel %vm957, %v708, -inf
        %v1638 = vrot.slane %v1637, 4
        %v1639 = vmax.f32 %v1637, %v1638
        %v1640 = vrot.slane %v1639, 2
        %v1641 = vmax.f32 %v1639, %v1640
        %v1642 = vrot.slane %v1641, 1
        %v1643 = vmax.f32 %v1641, %v1642
        %v1644 = vsel %vm957, %v707, -inf
        %v1645 = vrot.slane %v1644, 4
        %v1646 = vmax.f32 %v1644, %v1645
        %v1647 = vrot.slane %v1646, 2
        %v1648 = vmax.f32 %v1646, %v1647
        %v1649 = vrot.slane %v1648, 1
        %v1650 = vmax.f32 %v1648, %v1649
        %v1651 = vsel %vm957, %v709, -inf
        %v1652 = vrot.slane %v1651, 4
        %v1653 = vmax.f32 %v1651, %v1652
        %v1654 = vrot.slane %v1653, 2
        %v1655 = vmax.f32 %v1653, %v1654
        %v1656 = vrot.slane %v1655, 1
        %v1657 = vmax.f32 %v1655, %v1656
        %v1658 = vsel %vm957, %v717, -inf
        %v1659 = vrot.slane %v1658, 4
        %v1660 = vmax.f32 %v1658, %v1659
        %v1661 = vrot.slane %v1660, 2
        %v1662 = vmax.f32 %v1660, %v1661
        %v1663 = vrot.slane %v1662, 1
        %v1664 = vmax.f32 %v1662, %v1663
        %v1665 = vsel %vm957, %v725, -inf
        %v1666 = vrot.slane %v1665, 4
        %v1667 = vmax.f32 %v1665, %v1666
        %v1668 = vrot.slane %v1667, 2
        %v1669 = vmax.f32 %v1667, %v1668
        %v1670 = vrot.slane %v1669, 1
        %v1671 = vmax.f32 %v1669, %v1670
        %v1672 = vsel %vm957, %v724, -inf
        %v1673 = vrot.slane %v1672, 4
        %v1674 = vmax.f32 %v1672, %v1673
        %v1675 = vrot.slane %v1674, 2
        %v1676 = vmax.f32 %v1674, %v1675
        %v1677 = vrot.slane %v1676, 1
        %v1678 = vmax.f32 %v1676, %v1677
        %v1679 = vsel %vm957, %v726, -inf
        %v1680 = vrot.slane %v1679, 4
        %v1681 = vmax.f32 %v1679, %v1680
        %v1682 = vrot.slane %v1681, 2
        %v1683 = vmax.f32 %v1681, %v1682
        %v1684 = vrot.slane %v1683, 1
        %v1685 = vmax.f32 %v1683, %v1684
        %v1686 = vsel %vm957, %v734, -inf
        %v1687 = vrot.slane %v1686, 4
        %v1688 = vmax.f32 %v1686, %v1687
        %v1689 = vrot.slane %v1688, 2
        %v1690 = vmax.f32 %v1688, %v1689
        %v1691 = vrot.slane %v1690, 1
        %v1692 = vmax.f32 %v1690, %v1691
        %v1693 = vsel %vm957, %v742, -inf
        %v1694 = vrot.slane %v1693, 4
        %v1695 = vmax.f32 %v1693, %v1694
        %v1696 = vrot.slane %v1695, 2
        %v1697 = vmax.f32 %v1695, %v1696
        %v1698 = vrot.slane %v1697, 1
        %v1699 = vmax.f32 %v1697, %v1698
        %v1700 = vsel %vm957, %v741, -inf
        %v1701 = vrot.slane %v1700, 4
        %v1702 = vmax.f32 %v1700, %v1701
        %v1703 = vrot.slane %v1702, 2
        %v1704 = vmax.f32 %v1702, %v1703
        %v1705 = vrot.slane %v1704, 1
        %v1706 = vmax.f32 %v1704, %v1705
        %v1707 = vsel %vm957, %v743, -inf
        %v1708 = vrot.slane %v1707, 4
        %v1709 = vmax.f32 %v1707, %v1708
        %v1710 = vrot.slane %v1709, 2
        %v1711 = vmax.f32 %v1709, %v1710
        %v1712 = vrot.slane %v1711, 1
        %v1713 = vmax.f32 %v1711, %v1712
        %v1714 = vsel %vm957, %v751, -inf
        %v1715 = vrot.slane %v1714, 4
        %v1716 = vmax.f32 %v1714, %v1715
        %v1717 = vrot.slane %v1716, 2
        %v1718 = vmax.f32 %v1716, %v1717
        %v1719 = vrot.slane %v1718, 1
        %v1720 = vmax.f32 %v1718, %v1719
        %v1721 = vsel %vm957, %v759, -inf
        %v1722 = vrot.slane %v1721, 4
        %v1723 = vmax.f32 %v1721, %v1722
        %v1724 = vrot.slane %v1723, 2
        %v1725 = vmax.f32 %v1723, %v1724
        %v1726 = vrot.slane %v1725, 1
        %v1727 = vmax.f32 %v1725, %v1726
        %v1728 = vsel %vm957, %v758, -inf
        %v1729 = vrot.slane %v1728, 4
        %v1730 = vmax.f32 %v1728, %v1729
        %v1731 = vrot.slane %v1730, 2
        %v1732 = vmax.f32 %v1730, %v1731
        %v1733 = vrot.slane %v1732, 1
        %v1734 = vmax.f32 %v1732, %v1733
        %v1735 = vsel %vm957, %v760, -inf
        %v1736 = vrot.slane %v1735, 4
        %v1737 = vmax.f32 %v1735, %v1736
        %v1738 = vrot.slane %v1737, 2
        %v1739 = vmax.f32 %v1737, %v1738
        %v1740 = vrot.slane %v1739, 1
        %v1741 = vmax.f32 %v1739, %v1740
        %v1742 = vsel %vm957, %v768, -inf
        %v1743 = vrot.slane %v1742, 4
        %v1744 = vmax.f32 %v1742, %v1743
        %v1745 = vrot.slane %v1744, 2
        %v1746 = vmax.f32 %v1744, %v1745
        %v1747 = vrot.slane %v1746, 1
        %v1748 = vmax.f32 %v1746, %v1747
        %v1749 = vsel %vm957, %v776, -inf
        %v1750 = vrot.slane %v1749, 4
        %v1751 = vmax.f32 %v1749, %v1750
        %v1752 = vrot.slane %v1751, 2
        %v1753 = vmax.f32 %v1751, %v1752
        %v1754 = vrot.slane %v1753, 1
        %v1755 = vmax.f32 %v1753, %v1754
        %v1756 = vsel %vm957, %v775, -inf
        %v1757 = vrot.slane %v1756, 4
        %v1758 = vmax.f32 %v1756, %v1757
        %v1759 = vrot.slane %v1758, 2
        %v1760 = vmax.f32 %v1758, %v1759
        %v1761 = vrot.slane %v1760, 1
        %v1762 = vmax.f32 %v1760, %v1761
        %v1763 = vsel %vm957, %v777, -inf
        %v1764 = vrot.slane %v1763, 4
        %v1765 = vmax.f32 %v1763, %v1764
        %v1766 = vrot.slane %v1765, 2
        %v1767 = vmax.f32 %v1765, %v1766
        %v1768 = vrot.slane %v1767, 1
        %v1769 = vmax.f32 %v1767, %v1768
        %v1770 = vsel %vm957, %v785, -inf
        %v1771 = vrot.slane %v1770, 4
        %v1772 = vmax.f32 %v1770, %v1771
        %v1773 = vrot.slane %v1772, 2
        %v1774 = vmax.f32 %v1772, %v1773
        %v1775 = vrot.slane %v1774, 1
        %v1776 = vmax.f32 %v1774, %v1775
        %v1777 = vsel %vm957, %v793, -inf
        %v1778 = vrot.slane %v1777, 4
        %v1779 = vmax.f32 %v1777, %v1778
        %v1780 = vrot.slane %v1779, 2
        %v1781 = vmax.f32 %v1779, %v1780
        %v1782 = vrot.slane %v1781, 1
        %v1783 = vmax.f32 %v1781, %v1782
        %v1784 = vsel %vm957, %v792, -inf
        %v1785 = vrot.slane %v1784, 4
        %v1786 = vmax.f32 %v1784, %v1785
        %v1787 = vrot.slane %v1786, 2
        %v1788 = vmax.f32 %v1786, %v1787
        %v1789 = vrot.slane %v1788, 1
        %v1790 = vmax.f32 %v1788, %v1789
        %v1791 = vsel %vm957, %v794, -inf
        %v1792 = vrot.slane %v1791, 4
        %v1793 = vmax.f32 %v1791, %v1792
        %v1794 = vrot.slane %v1793, 2
        %v1795 = vmax.f32 %v1793, %v1794
        %v1796 = vrot.slane %v1795, 1
        %v1797 = vmax.f32 %v1795, %v1796
        %v1798 = vsel %vm957, %v802, -inf
        %v1799 = vrot.slane %v1798, 4
        %v1800 = vmax.f32 %v1798, %v1799
        %v1801 = vrot.slane %v1800, 2
        %v1802 = vmax.f32 %v1800, %v1801
        %v1803 = vrot.slane %v1802, 1
        %v1804 = vmax.f32 %v1802, %v1803
        %v1805 = vsel %vm957, %v810, -inf
        %v1806 = vrot.slane %v1805, 4
        %v1807 = vmax.f32 %v1805, %v1806
        %v1808 = vrot.slane %v1807, 2
        %v1809 = vmax.f32 %v1807, %v1808
        %v1810 = vrot.slane %v1809, 1
        %v1811 = vmax.f32 %v1809, %v1810
        %v1812 = vsel %vm957, %v809, -inf
        %v1813 = vrot.slane %v1812, 4
        %v1814 = vmax.f32 %v1812, %v1813
        %v1815 = vrot.slane %v1814, 2
        %v1816 = vmax.f32 %v1814, %v1815
        %v1817 = vrot.slane %v1816, 1
        %v1818 = vmax.f32 %v1816, %v1817
        %v1819 = vsel %vm957, %v811, -inf
        %v1820 = vrot.slane %v1819, 4
        %v1821 = vmax.f32 %v1819, %v1820
        %v1822 = vrot.slane %v1821, 2
        %v1823 = vmax.f32 %v1821, %v1822
        %v1824 = vrot.slane %v1823, 1
        %v1825 = vmax.f32 %v1823, %v1824
        %v1826 = vsel %vm957, %v819, -inf
        %v1827 = vrot.slane %v1826, 4
        %v1828 = vmax.f32 %v1826, %v1827
        %v1829 = vrot.slane %v1828, 2
        %v1830 = vmax.f32 %v1828, %v1829
        %v1831 = vrot.slane %v1830, 1
        %v1832 = vmax.f32 %v1830, %v1831
        %v1833 = vsel %vm957, %v827, -inf
        %v1834 = vrot.slane %v1833, 4
        %v1835 = vmax.f32 %v1833, %v1834
        %v1836 = vrot.slane %v1835, 2
        %v1837 = vmax.f32 %v1835, %v1836
        %v1838 = vrot.slane %v1837, 1
        %v1839 = vmax.f32 %v1837, %v1838
        %v1840 = vsel %vm957, %v826, -inf
        %v1841 = vrot.slane %v1840, 4
        %v1842 = vmax.f32 %v1840, %v1841
        %v1843 = vrot.slane %v1842, 2
        %v1844 = vmax.f32 %v1842, %v1843
        %v1845 = vrot.slane %v1844, 1
        %v1846 = vmax.f32 %v1844, %v1845
        %v1847 = vsel %vm957, %v828, -inf
        %v1848 = vrot.slane %v1847, 4
        %v1849 = vmax.f32 %v1847, %v1848
        %v1850 = vrot.slane %v1849, 2
        %v1851 = vmax.f32 %v1849, %v1850
        %v1852 = vrot.slane %v1851, 1
        %v1853 = vmax.f32 %v1851, %v1852
        %vm1854 = vcmask 31744
        %v1855 = vsel %vm1854, %v964, -inf
        %v1856 = vsel %vm1854, %v1020, -inf
        %v1857 = vmax.f32 %v1855, %v1856
        %v1858 = vsel %vm1854, %v971, -inf
        %v1859 = vsel %vm1854, %v1027, -inf
        %v1860 = vmax.f32 %v1858, %v1859
        %v1861 = vsel %vm1854, %v978, -inf
        %v1862 = vsel %vm1854, %v1034, -inf
        %v1863 = vmax.f32 %v1861, %v1862
        %v1864 = vsel %vm1854, %v985, -inf
        %v1865 = vsel %vm1854, %v1041, -inf
        %v1866 = vmax.f32 %v1864, %v1865
        %v1867 = vsel %vm1854, %v992, -inf
        %v1868 = vsel %vm1854, %v1048, -inf
        %v1869 = vmax.f32 %v1867, %v1868
        %v1870 = vsel %vm1854, %v999, -inf
        %v1871 = vsel %vm1854, %v1055, -inf
        %v1872 = vmax.f32 %v1870, %v1871
        %v1873 = vsel %vm1854, %v1006, -inf
        %v1874 = vsel %vm1854, %v1062, -inf
        %v1875 = vmax.f32 %v1873, %v1874
        %v1876 = vsel %vm1854, %v1013, -inf
        %v1877 = vsel %vm1854, %v1069, -inf
        %v1878 = vmax.f32 %v1876, %v1877
        %v1879 = vsel %vm1854, %v1076, -inf
        %v1880 = vsel %vm1854, %v1132, -inf
        %v1881 = vmax.f32 %v1879, %v1880
        %v1882 = vsel %vm1854, %v1083, -inf
        %v1883 = vsel %vm1854, %v1139, -inf
        %v1884 = vmax.f32 %v1882, %v1883
        %v1885 = vsel %vm1854, %v1090, -inf
        %v1886 = vsel %vm1854, %v1146, -inf
        %v1887 = vmax.f32 %v1885, %v1886
        %v1888 = vsel %vm1854, %v1097, -inf
        %v1889 = vsel %vm1854, %v1153, -inf
        %v1890 = vmax.f32 %v1888, %v1889
        %v1891 = vsel %vm1854, %v1104, -inf
        %v1892 = vsel %vm1854, %v1160, -inf
        %v1893 = vmax.f32 %v1891, %v1892
        %v1894 = vsel %vm1854, %v1111, -inf
        %v1895 = vsel %vm1854, %v1167, -inf
        %v1896 = vmax.f32 %v1894, %v1895
        %v1897 = vsel %vm1854, %v1118, -inf
        %v1898 = vsel %vm1854, %v1174, -inf
        %v1899 = vmax.f32 %v1897, %v1898
        %v1900 = vsel %vm1854, %v1125, -inf
        %v1901 = vsel %vm1854, %v1181, -inf
        %v1902 = vmax.f32 %v1900, %v1901
        %v1903 = vsel %vm1854, %v1188, -inf
        %v1904 = vsel %vm1854, %v1244, -inf
        %v1905 = vmax.f32 %v1903, %v1904
        %v1906 = vsel %vm1854, %v1195, -inf
        %v1907 = vsel %vm1854, %v1251, -inf
        %v1908 = vmax.f32 %v1906, %v1907
        %v1909 = vsel %vm1854, %v1202, -inf
        %v1910 = vsel %vm1854, %v1258, -inf
        %v1911 = vmax.f32 %v1909, %v1910
        %v1912 = vsel %vm1854, %v1209, -inf
        %v1913 = vsel %vm1854, %v1265, -inf
        %v1914 = vmax.f32 %v1912, %v1913
        %v1915 = vsel %vm1854, %v1216, -inf
        %v1916 = vsel %vm1854, %v1272, -inf
        %v1917 = vmax.f32 %v1915, %v1916
        %v1918 = vsel %vm1854, %v1223, -inf
        %v1919 = vsel %vm1854, %v1279, -inf
        %v1920 = vmax.f32 %v1918, %v1919
        %v1921 = vsel %vm1854, %v1230, -inf
        %v1922 = vsel %vm1854, %v1286, -inf
        %v1923 = vmax.f32 %v1921, %v1922
        %v1924 = vsel %vm1854, %v1237, -inf
        %v1925 = vsel %vm1854, %v1293, -inf
        %v1926 = vmax.f32 %v1924, %v1925
        %v1927 = vsel %vm1854, %v1300, -inf
        %v1928 = vsel %vm1854, %v1356, -inf
        %v1929 = vmax.f32 %v1927, %v1928
        %v1930 = vsel %vm1854, %v1307, -inf
        %v1931 = vsel %vm1854, %v1363, -inf
        %v1932 = vmax.f32 %v1930, %v1931
        %v1933 = vsel %vm1854, %v1314, -inf
        %v1934 = vsel %vm1854, %v1370, -inf
        %v1935 = vmax.f32 %v1933, %v1934
        %v1936 = vsel %vm1854, %v1321, -inf
        %v1937 = vsel %vm1854, %v1377, -inf
        %v1938 = vmax.f32 %v1936, %v1937
        %v1939 = vsel %vm1854, %v1328, -inf
        %v1940 = vsel %vm1854, %v1384, -inf
        %v1941 = vmax.f32 %v1939, %v1940
        %v1942 = vsel %vm1854, %v1335, -inf
        %v1943 = vsel %vm1854, %v1391, -inf
        %v1944 = vmax.f32 %v1942, %v1943
        %v1945 = vsel %vm1854, %v1342, -inf
        %v1946 = vsel %vm1854, %v1398, -inf
        %v1947 = vmax.f32 %v1945, %v1946
        %v1948 = vsel %vm1854, %v1349, -inf
        %v1949 = vsel %vm1854, %v1405, -inf
        %v1950 = vmax.f32 %v1948, %v1949
        %v1951 = vsel %vm1854, %v1412, -inf
        %v1952 = vsel %vm1854, %v1468, -inf
        %v1953 = vmax.f32 %v1951, %v1952
        %v1954 = vsel %vm1854, %v1419, -inf
        %v1955 = vsel %vm1854, %v1475, -inf
        %v1956 = vmax.f32 %v1954, %v1955
        %v1957 = vsel %vm1854, %v1426, -inf
        %v1958 = vsel %vm1854, %v1482, -inf
        %v1959 = vmax.f32 %v1957, %v1958
        %v1960 = vsel %vm1854, %v1433, -inf
        %v1961 = vsel %vm1854, %v1489, -inf
        %v1962 = vmax.f32 %v1960, %v1961
        %v1963 = vsel %vm1854, %v1440, -inf
        %v1964 = vsel %vm1854, %v1496, -inf
        %v1965 = vmax.f32 %v1963, %v1964
        %v1966 = vsel %vm1854, %v1447, -inf
        %v1967 = vsel %vm1854, %v1503, -inf
        %v1968 = vmax.f32 %v1966, %v1967
        %v1969 = vsel %vm1854, %v1454, -inf
        %v1970 = vsel %vm1854, %v1510, -inf
        %v1971 = vmax.f32 %v1969, %v1970
        %v1972 = vsel %vm1854, %v1461, -inf
        %v1973 = vsel %vm1854, %v1517, -inf
        %v1974 = vmax.f32 %v1972, %v1973
        %v1975 = vsel %vm1854, %v1524, -inf
        %v1976 = vsel %vm1854, %v1580, -inf
        %v1977 = vmax.f32 %v1975, %v1976
        %v1978 = vsel %vm1854, %v1531, -inf
        %v1979 = vsel %vm1854, %v1587, -inf
        %v1980 = vmax.f32 %v1978, %v1979
        %v1981 = vsel %vm1854, %v1538, -inf
        %v1982 = vsel %vm1854, %v1594, -inf
        %v1983 = vmax.f32 %v1981, %v1982
        %v1984 = vsel %vm1854, %v1545, -inf
        %v1985 = vsel %vm1854, %v1601, -inf
        %v1986 = vmax.f32 %v1984, %v1985
        %v1987 = vsel %vm1854, %v1552, -inf
        %v1988 = vsel %vm1854, %v1608, -inf
        %v1989 = vmax.f32 %v1987, %v1988
        %v1990 = vsel %vm1854, %v1559, -inf
        %v1991 = vsel %vm1854, %v1615, -inf
        %v1992 = vmax.f32 %v1990, %v1991
        %v1993 = vsel %vm1854, %v1566, -inf
        %v1994 = vsel %vm1854, %v1622, -inf
        %v1995 = vmax.f32 %v1993, %v1994
        %v1996 = vsel %vm1854, %v1573, -inf
        %v1997 = vsel %vm1854, %v1629, -inf
        %v1998 = vmax.f32 %v1996, %v1997
        %v1999 = vsel %vm1854, %v1636, -inf
        %v2000 = vsel %vm1854, %v1692, -inf
        %v2001 = vmax.f32 %v1999, %v2000
        %v2002 = vsel %vm1854, %v1643, -inf
        %v2003 = vsel %vm1854, %v1699, -inf
        %v2004 = vmax.f32 %v2002, %v2003
        %v2005 = vsel %vm1854, %v1650, -inf
        %v2006 = vsel %vm1854, %v1706, -inf
        %v2007 = vmax.f32 %v2005, %v2006
        %v2008 = vsel %vm1854, %v1657, -inf
        %v2009 = vsel %vm1854, %v1713, -inf
        %v2010 = vmax.f32 %v2008, %v2009
        %v2011 = vsel %vm1854, %v1664, -inf
        %v2012 = vsel %vm1854, %v1720, -inf
        %v2013 = vmax.f32 %v2011, %v2012
        %v2014 = vsel %vm1854, %v1671, -inf
        %v2015 = vsel %vm1854, %v1727, -inf
        %v2016 = vmax.f32 %v2014, %v2015
        %v2017 = vsel %vm1854, %v1678, -inf
        %v2018 = vsel %vm1854, %v1734, -inf
        %v2019 = vmax.f32 %v2017, %v2018
        %v2020 = vsel %vm1854, %v1685, -inf
        %v2021 = vsel %vm1854, %v1741, -inf
        %v2022 = vmax.f32 %v2020, %v2021
        %v2023 = vsel %vm1854, %v1748, -inf
        %v2024 = vsel %vm1854, %v1804, -inf
        %v2025 = vmax.f32 %v2023, %v2024
        %v2026 = vsel %vm1854, %v1755, -inf
        %v2027 = vsel %vm1854, %v1811, -inf
        %v2028 = vmax.f32 %v2026, %v2027
        %v2029 = vsel %vm1854, %v1762, -inf
        %v2030 = vsel %vm1854, %v1818, -inf
        %v2031 = vmax.f32 %v2029, %v2030
        %v2032 = vsel %vm1854, %v1769, -inf
        %v2033 = vsel %vm1854, %v1825, -inf
        %v2034 = vmax.f32 %v2032, %v2033
        %v2035 = vsel %vm1854, %v1776, -inf
        %v2036 = vsel %vm1854, %v1832, -inf
        %v2037 = vmax.f32 %v2035, %v2036
        %v2038 = vsel %vm1854, %v1783, -inf
        %v2039 = vsel %vm1854, %v1839, -inf
        %v2040 = vmax.f32 %v2038, %v2039
        %v2041 = vsel %vm1854, %v1790, -inf
        %v2042 = vsel %vm1854, %v1846, -inf
        %v2043 = vmax.f32 %v2041, %v2042
        %v2044 = vsel %vm1854, %v1797, -inf
        %v2045 = vsel %vm1854, %v1853, -inf
        %v2046 = vmax.f32 %v2044, %v2045
        %vm2111 = vcmask 1041409
        %v2112 = vsel %vm2111, %v1860, %v1857
        %vm2113 = vcmask 1042434
        %v2114 = vsel %vm2113, %v1863, %v2112
        %vm2115 = vcmask 1043459
        %v2116 = vsel %vm2115, %v1866, %v2114
        %vm2117 = vcmask 1044484
        %v2118 = vsel %vm2117, %v1869, %v2116
        %vm2119 = vcmask 1045509
        %v2120 = vsel %vm2119, %v1872, %v2118
        %vm2121 = vcmask 1046534
        %v2122 = vsel %vm2121, %v1875, %v2120
        %vm2123 = vcmask 1047559
        %v2124 = vsel %vm2123, %v1878, %v2122
        %v2125 = vsel %vm2111, %v1884, %v1881
        %v2126 = vsel %vm2113, %v1887, %v2125
        %v2127 = vsel %vm2115, %v1890, %v2126
        %v2128 = vsel %vm2117, %v1893, %v2127
        %v2129 = vsel %vm2119, %v1896, %v2128
        %v2130 = vsel %vm2121, %v1899, %v2129
        %v2131 = vsel %vm2123, %v1902, %v2130
        %v2132 = vsel %vm2111, %v1908, %v1905
        %v2133 = vsel %vm2113, %v1911, %v2132
        %v2134 = vsel %vm2115, %v1914, %v2133
        %v2135 = vsel %vm2117, %v1917, %v2134
        %v2136 = vsel %vm2119, %v1920, %v2135
        %v2137 = vsel %vm2121, %v1923, %v2136
        %v2138 = vsel %vm2123, %v1926, %v2137
        %v2139 = vsel %vm2111, %v1932, %v1929
        %v2140 = vsel %vm2113, %v1935, %v2139
        %v2141 = vsel %vm2115, %v1938, %v2140
        %v2142 = vsel %vm2117, %v1941, %v2141
        %v2143 = vsel %vm2119, %v1944, %v2142
        %v2144 = vsel %vm2121, %v1947, %v2143
        %v2145 = vsel %vm2123, %v1950, %v2144
        %v2146 = vsel %vm2111, %v1956, %v1953
        %v2147 = vsel %vm2113, %v1959, %v2146
        %v2148 = vsel %vm2115, %v1962, %v2147
        %v2149 = vsel %vm2117, %v1965, %v2148
        %v2150 = vsel %vm2119, %v1968, %v2149
        %v2151 = vsel %vm2121, %v1971, %v2150
        %v2152 = vsel %vm2123, %v1974, %v2151
        %v2153 = vsel %vm2111, %v1980, %v1977
        %v2154 = vsel %vm2113, %v1983, %v2153
        %v2155 = vsel %vm2115, %v1986, %v2154
        %v2156 = vsel %vm2117, %v1989, %v2155
        %v2157 = vsel %vm2119, %v1992, %v2156
        %v2158 = vsel %vm2121, %v1995, %v2157
        %v2159 = vsel %vm2123, %v1998, %v2158
        %v2160 = vsel %vm2111, %v2004, %v2001
        %v2161 = vsel %vm2113, %v2007, %v2160
        %v2162 = vsel %vm2115, %v2010, %v2161
        %v2163 = vsel %vm2117, %v2013, %v2162
        %v2164 = vsel %vm2119, %v2016, %v2163
        %v2165 = vsel %vm2121, %v2019, %v2164
        %v2166 = vsel %vm2123, %v2022, %v2165
        %v2167 = vsel %vm2111, %v2028, %v2025
        %v2168 = vsel %vm2113, %v2031, %v2167
        %v2169 = vsel %vm2115, %v2034, %v2168
        %v2170 = vsel %vm2117, %v2037, %v2169
        %v2171 = vsel %vm2119, %v2040, %v2170
        %v2172 = vsel %vm2121, %v2043, %v2171
        %v2173 = vsel %vm2123, %v2046, %v2172
        %s2182 = scalar_lea.vmem [#allocation2], 16
        %2183 = vst.msk [vmem:[%s2182 + $0x1] sm:$0xff] %vm1854, %v2124
        %2184 = vst.msk [vmem:[%s2182 + $0x11] sm:$0xff] %vm1854, %v2131
        %2185 = vst.msk [vmem:[%s2182 + $0x21] sm:$0xff] %vm1854, %v2138
        %2186 = vst.msk [vmem:[%s2182 + $0x31] sm:$0xff] %vm1854, %v2145
        %2187 = vst.msk [vmem:[%s2182 + $0x41] sm:$0xff] %vm1854, %v2152
        %2188 = vst.msk [vmem:[%s2182 + $0x51] sm:$0xff] %vm1854, %v2159
        %2189 = vst.msk [vmem:[%s2182 + $0x61] sm:$0xff] %vm1854, %v2166
        %2190 = vst.msk [vmem:[%s2182 + $0x71] sm:$0xff] %vm1854, %v2173
        %v2191 = vld [vmem:[#allocation2] sm:$0xff]
        %v2192 = vld [vmem:[#allocation2 + $0x10] sm:$0xff]
        %v2193 = vld [vmem:[#allocation2 + $0x20] sm:$0xff]
        %v2194 = vld [vmem:[#allocation2 + $0x30] sm:$0xff]
        %v2195 = vld [vmem:[#allocation2 + $0x40] sm:$0xff]
        %v2196 = vld [vmem:[#allocation2 + $0x50] sm:$0xff]
        %v2197 = vld [vmem:[#allocation2 + $0x60] sm:$0xff]
        %v2198 = vld [vmem:[#allocation2 + $0x70] sm:$0xff]
        %2199 = vst.msk [vmem:[#allocation3] sm:$0xff] %vm1854, %v2191
        %2200 = vst.msk [vmem:[#allocation3 + $0x8] sm:$0xff] %vm1854, %v2192
        %2201 = vst.msk [vmem:[#allocation3 + $0x10] sm:$0xff] %vm1854, %v2193
        %2202 = vst.msk [vmem:[#allocation3 + $0x18] sm:$0xff] %vm1854, %v2194
        %2203 = vst.msk [vmem:[#allocation3 + $0x20] sm:$0xff] %vm1854, %v2195
        %2204 = vst.msk [vmem:[#allocation3 + $0x28] sm:$0xff] %vm1854, %v2196
        %2205 = vst.msk [vmem:[#allocation3 + $0x30] sm:$0xff] %vm1854, %v2197
        %2206 = vst.msk [vmem:[#allocation3 + $0x38] sm:$0xff] %vm1854, %v2198
        %v2207 = vld [vmem:[#allocation2 + $0x1] sm:$0xff]
        %v2208 = vld [vmem:[#allocation2 + $0x11] sm:$0xff]
        %v2209 = vld [vmem:[#allocation2 + $0x21] sm:$0xff]
        %v2210 = vld [vmem:[#allocation2 + $0x31] sm:$0xff]
        %v2211 = vld [vmem:[#allocation2 + $0x41] sm:$0xff]
        %v2212 = vld [vmem:[#allocation2 + $0x51] sm:$0xff]
        %v2213 = vld [vmem:[#allocation2 + $0x61] sm:$0xff]
        %v2214 = vld [vmem:[#allocation2 + $0x71] sm:$0xff]
        %2223 = vrot.lane.b32.xlu0 %v2207, 4
        %v2224 = vpop.permute.xlu0 %2223
        %2225 = vrot.lane.b32.xlu0 %v2208, 4
        %v2226 = vpop.permute.xlu0 %2225
        %2227 = vrot.lane.b32.xlu0 %v2209, 4
        %v2228 = vpop.permute.xlu0 %2227
        %2229 = vrot.lane.b32.xlu0 %v2210, 4
        %v2230 = vpop.permute.xlu0 %2229
        %2231 = vrot.lane.b32.xlu0 %v2211, 4
        %v2232 = vpop.permute.xlu0 %2231
        %2233 = vrot.lane.b32.xlu0 %v2212, 4
        %v2234 = vpop.permute.xlu0 %2233
        %2235 = vrot.lane.b32.xlu0 %v2213, 4
        %v2236 = vpop.permute.xlu0 %2235
        %2237 = vrot.lane.b32.xlu0 %v2214, 4
        %v2238 = vpop.permute.xlu0 %2237
        %vm2247 = vcmask 64544
        %2248 = vst.msk [vmem:[#allocation3] sm:$0xff] %vm2247, %v2224
        %2249 = vst.msk [vmem:[#allocation3 + $0x8] sm:$0xff] %vm2247, %v2226
        %2250 = vst.msk [vmem:[#allocation3 + $0x10] sm:$0xff] %vm2247, %v2228
        %2251 = vst.msk [vmem:[#allocation3 + $0x18] sm:$0xff] %vm2247, %v2230
        %2252 = vst.msk [vmem:[#allocation3 + $0x20] sm:$0xff] %vm2247, %v2232
        %2253 = vst.msk [vmem:[#allocation3 + $0x28] sm:$0xff] %vm2247, %v2234
        %2254 = vst.msk [vmem:[#allocation3 + $0x30] sm:$0xff] %vm2247, %v2236
        %2255 = vst.msk [vmem:[#allocation3 + $0x38] sm:$0xff] %vm2247, %v2238
        %v2256 = vld [vmem:[#allocation2 + $0x2] sm:$0xff]
        %v2257 = vld [vmem:[#allocation2 + $0x12] sm:$0xff]
        %v2258 = vld [vmem:[#allocation2 + $0x22] sm:$0xff]
        %v2259 = vld [vmem:[#allocation2 + $0x32] sm:$0xff]
        %v2260 = vld [vmem:[#allocation2 + $0x42] sm:$0xff]
        %v2261 = vld [vmem:[#allocation2 + $0x52] sm:$0xff]
        %v2262 = vld [vmem:[#allocation2 + $0x62] sm:$0xff]
        %v2263 = vld [vmem:[#allocation2 + $0x72] sm:$0xff]
        %2272 = vrot.lane.b32.xlu0 %v2256, 8
        %v2273 = vpop.permute.xlu0 %2272
        %2274 = vrot.lane.b32.xlu0 %v2257, 8
        %v2275 = vpop.permute.xlu0 %2274
        %2276 = vrot.lane.b32.xlu0 %v2258, 8
        %v2277 = vpop.permute.xlu0 %2276
        %2278 = vrot.lane.b32.xlu0 %v2259, 8
        %v2279 = vpop.permute.xlu0 %2278
        %2280 = vrot.lane.b32.xlu0 %v2260, 8
        %v2281 = vpop.permute.xlu0 %2280
        %2282 = vrot.lane.b32.xlu0 %v2261, 8
        %v2283 = vpop.permute.xlu0 %2282
        %2284 = vrot.lane.b32.xlu0 %v2262, 8
        %v2285 = vpop.permute.xlu0 %2284
        %2286 = vrot.lane.b32.xlu0 %v2263, 8
        %v2287 = vpop.permute.xlu0 %2286
        %vm2296 = vcmask 97344
        %2297 = vst.msk [vmem:[#allocation3] sm:$0xff] %vm2296, %v2273
        %2298 = vst.msk [vmem:[#allocation3 + $0x8] sm:$0xff] %vm2296, %v2275
        %2299 = vst.msk [vmem:[#allocation3 + $0x10] sm:$0xff] %vm2296, %v2277
        %2300 = vst.msk [vmem:[#allocation3 + $0x18] sm:$0xff] %vm2296, %v2279
        %2301 = vst.msk [vmem:[#allocation3 + $0x20] sm:$0xff] %vm2296, %v2281
        %2302 = vst.msk [vmem:[#allocation3 + $0x28] sm:$0xff] %vm2296, %v2283
        %2303 = vst.msk [vmem:[#allocation3 + $0x30] sm:$0xff] %vm2296, %v2285
        %2304 = vst.msk [vmem:[#allocation3 + $0x38] sm:$0xff] %vm2296, %v2287
        %v2305 = vld [vmem:[%s2182] sm:$0xff]
        %v2306 = vld [vmem:[%s2182 + $0x10] sm:$0xff]
        %v2307 = vld [vmem:[%s2182 + $0x20] sm:$0xff]
        %v2308 = vld [vmem:[%s2182 + $0x30] sm:$0xff]
        %v2309 = vld [vmem:[%s2182 + $0x40] sm:$0xff]
        %v2310 = vld [vmem:[%s2182 + $0x50] sm:$0xff]
        %v2311 = vld [vmem:[%s2182 + $0x60] sm:$0xff]
        %v2312 = vld [vmem:[%s2182 + $0x70] sm:$0xff]
        %2321 = vrot.lane.b32.xlu0 %v2305, 12
        %v2322 = vpop.permute.xlu0 %2321
        %2323 = vrot.lane.b32.xlu0 %v2306, 12
        %v2324 = vpop.permute.xlu0 %2323
        %2325 = vrot.lane.b32.xlu0 %v2307, 12
        %v2326 = vpop.permute.xlu0 %2325
        %2327 = vrot.lane.b32.xlu0 %v2308, 12
        %v2328 = vpop.permute.xlu0 %2327
        %2329 = vrot.lane.b32.xlu0 %v2309, 12
        %v2330 = vpop.permute.xlu0 %2329
        %2331 = vrot.lane.b32.xlu0 %v2310, 12
        %v2332 = vpop.permute.xlu0 %2331
        %2333 = vrot.lane.b32.xlu0 %v2311, 12
        %v2334 = vpop.permute.xlu0 %2333
        %2335 = vrot.lane.b32.xlu0 %v2312, 12
        %v2336 = vpop.permute.xlu0 %2335
        %vm2345 = vcmask 130144
        %2346 = vst.msk [vmem:[#allocation3] sm:$0xff] %vm2345, %v2322
        %2347 = vst.msk [vmem:[#allocation3 + $0x8] sm:$0xff] %vm2345, %v2324
        %2348 = vst.msk [vmem:[#allocation3 + $0x10] sm:$0xff] %vm2345, %v2326
        %2349 = vst.msk [vmem:[#allocation3 + $0x18] sm:$0xff] %vm2345, %v2328
        %2350 = vst.msk [vmem:[#allocation3 + $0x20] sm:$0xff] %vm2345, %v2330
        %2351 = vst.msk [vmem:[#allocation3 + $0x28] sm:$0xff] %vm2345, %v2332
        %2352 = vst.msk [vmem:[#allocation3 + $0x30] sm:$0xff] %vm2345, %v2334
        %2353 = vst.msk [vmem:[#allocation3 + $0x38] sm:$0xff] %vm2345, %v2336
        %v2354 = vld [vmem:[%s2182 + $0x1] sm:$0xff]
        %v2355 = vld [vmem:[%s2182 + $0x11] sm:$0xff]
        %v2356 = vld [vmem:[%s2182 + $0x21] sm:$0xff]
        %v2357 = vld [vmem:[%s2182 + $0x31] sm:$0xff]
        %v2358 = vld [vmem:[%s2182 + $0x41] sm:$0xff]
        %v2359 = vld [vmem:[%s2182 + $0x51] sm:$0xff]
        %v2360 = vld [vmem:[%s2182 + $0x61] sm:$0xff]
        %v2361 = vld [vmem:[%s2182 + $0x71] sm:$0xff]
        %2370 = vrot.lane.b32.xlu0 %v2354, 16
        %v2371 = vpop.permute.xlu0 %2370
        %2372 = vrot.lane.b32.xlu0 %v2355, 16
        %v2373 = vpop.permute.xlu0 %2372
        %2374 = vrot.lane.b32.xlu0 %v2356, 16
        %v2375 = vpop.permute.xlu0 %2374
        %2376 = vrot.lane.b32.xlu0 %v2357, 16
        %v2377 = vpop.permute.xlu0 %2376
        %2378 = vrot.lane.b32.xlu0 %v2358, 16
        %v2379 = vpop.permute.xlu0 %2378
        %2380 = vrot.lane.b32.xlu0 %v2359, 16
        %v2381 = vpop.permute.xlu0 %2380
        %2382 = vrot.lane.b32.xlu0 %v2360, 16
        %v2383 = vpop.permute.xlu0 %2382
        %2384 = vrot.lane.b32.xlu0 %v2361, 16
        %v2385 = vpop.permute.xlu0 %2384
        %vm2394 = vcmask 162944
        %2395 = vst.msk [vmem:[#allocation3] sm:$0xff] %vm2394, %v2371
        %2396 = vst.msk [vmem:[#allocation3 + $0x8] sm:$0xff] %vm2394, %v2373
        %2397 = vst.msk [vmem:[#allocation3 + $0x10] sm:$0xff] %vm2394, %v2375
        %2398 = vst.msk [vmem:[#allocation3 + $0x18] sm:$0xff] %vm2394, %v2377
        %2399 = vst.msk [vmem:[#allocation3 + $0x20] sm:$0xff] %vm2394, %v2379
        %2400 = vst.msk [vmem:[#allocation3 + $0x28] sm:$0xff] %vm2394, %v2381
        %2401 = vst.msk [vmem:[#allocation3 + $0x30] sm:$0xff] %vm2394, %v2383
        %2402 = vst.msk [vmem:[#allocation3 + $0x38] sm:$0xff] %vm2394, %v2385
        %v2403 = vld [vmem:[%s2182 + $0x2] sm:$0xff]
        %v2404 = vld [vmem:[%s2182 + $0x12] sm:$0xff]
        %v2405 = vld [vmem:[%s2182 + $0x22] sm:$0xff]
        %v2406 = vld [vmem:[%s2182 + $0x32] sm:$0xff]
        %v2407 = vld [vmem:[%s2182 + $0x42] sm:$0xff]
        %v2408 = vld [vmem:[%s2182 + $0x52] sm:$0xff]
        %v2409 = vld [vmem:[%s2182 + $0x62] sm:$0xff]
        %v2410 = vld [vmem:[%s2182 + $0x72] sm:$0xff]
        %2419 = vrot.lane.b32.xlu0 %v2403, 20
        %v2420 = vpop.permute.xlu0 %2419
        %2421 = vrot.lane.b32.xlu0 %v2404, 20
        %v2422 = vpop.permute.xlu0 %2421
        %2423 = vrot.lane.b32.xlu0 %v2405, 20
        %v2424 = vpop.permute.xlu0 %2423
        %2425 = vrot.lane.b32.xlu0 %v2406, 20
        %v2426 = vpop.permute.xlu0 %2425
        %2427 = vrot.lane.b32.xlu0 %v2407, 20
        %v2428 = vpop.permute.xlu0 %2427
        %2429 = vrot.lane.b32.xlu0 %v2408, 20
        %v2430 = vpop.permute.xlu0 %2429
        %2431 = vrot.lane.b32.xlu0 %v2409, 20
        %v2432 = vpop.permute.xlu0 %2431
        %2433 = vrot.lane.b32.xlu0 %v2410, 20
        %v2434 = vpop.permute.xlu0 %2433
        %vm2443 = vcmask 195744
        %2444 = vst.msk [vmem:[#allocation3] sm:$0xff] %vm2443, %v2420
        %2445 = vst.msk [vmem:[#allocation3 + $0x8] sm:$0xff] %vm2443, %v2422
        %2446 = vst.msk [vmem:[#allocation3 + $0x10] sm:$0xff] %vm2443, %v2424
        %2447 = vst.msk [vmem:[#allocation3 + $0x18] sm:$0xff] %vm2443, %v2426
        %2448 = vst.msk [vmem:[#allocation3 + $0x20] sm:$0xff] %vm2443, %v2428
        %2449 = vst.msk [vmem:[#allocation3 + $0x28] sm:$0xff] %vm2443, %v2430
        %2450 = vst.msk [vmem:[#allocation3 + $0x30] sm:$0xff] %vm2443, %v2432
        %2451 = vst.msk [vmem:[#allocation3 + $0x38] sm:$0xff] %vm2443, %v2434
        %s2452 = scalar_lea.vmem [#allocation2], 32
        %v2453 = vld [vmem:[%s2452] sm:$0xff]
        %v2454 = vld [vmem:[%s2452 + $0x10] sm:$0xff]
        %v2455 = vld [vmem:[%s2452 + $0x20] sm:$0xff]
        %v2456 = vld [vmem:[%s2452 + $0x30] sm:$0xff]
        %v2457 = vld [vmem:[%s2452 + $0x40] sm:$0xff]
        %v2458 = vld [vmem:[%s2452 + $0x50] sm:$0xff]
        %v2459 = vld [vmem:[%s2452 + $0x60] sm:$0xff]
        %v2460 = vld [vmem:[%s2452 + $0x70] sm:$0xff]
        %2469 = vrot.lane.b32.xlu0 %v2453, 24
        %v2470 = vpop.permute.xlu0 %2469
        %2471 = vrot.lane.b32.xlu0 %v2454, 24
        %v2472 = vpop.permute.xlu0 %2471
        %2473 = vrot.lane.b32.xlu0 %v2455, 24
        %v2474 = vpop.permute.xlu0 %2473
        %2475 = vrot.lane.b32.xlu0 %v2456, 24
        %v2476 = vpop.permute.xlu0 %2475
        %2477 = vrot.lane.b32.xlu0 %v2457, 24
        %v2478 = vpop.permute.xlu0 %2477
        %2479 = vrot.lane.b32.xlu0 %v2458, 24
        %v2480 = vpop.permute.xlu0 %2479
        %2481 = vrot.lane.b32.xlu0 %v2459, 24
        %v2482 = vpop.permute.xlu0 %2481
        %2483 = vrot.lane.b32.xlu0 %v2460, 24
        %v2484 = vpop.permute.xlu0 %2483
        %vm2493 = vcmask 228544
        %2494 = vst.msk [vmem:[#allocation3] sm:$0xff] %vm2493, %v2470
        %2495 = vst.msk [vmem:[#allocation3 + $0x8] sm:$0xff] %vm2493, %v2472
        %2496 = vst.msk [vmem:[#allocation3 + $0x10] sm:$0xff] %vm2493, %v2474
        %2497 = vst.msk [vmem:[#allocation3 + $0x18] sm:$0xff] %vm2493, %v2476
        %2498 = vst.msk [vmem:[#allocation3 + $0x20] sm:$0xff] %vm2493, %v2478
        %2499 = vst.msk [vmem:[#allocation3 + $0x28] sm:$0xff] %vm2493, %v2480
        %2500 = vst.msk [vmem:[#allocation3 + $0x30] sm:$0xff] %vm2493, %v2482
        %2501 = vst.msk [vmem:[#allocation3 + $0x38] sm:$0xff] %vm2493, %v2484
        %v2502 = vld [vmem:[%s2452 + $0x1] sm:$0xff]
        %v2503 = vld [vmem:[%s2452 + $0x11] sm:$0xff]
        %v2504 = vld [vmem:[%s2452 + $0x21] sm:$0xff]
        %v2505 = vld [vmem:[%s2452 + $0x31] sm:$0xff]
        %v2506 = vld [vmem:[%s2452 + $0x41] sm:$0xff]
        %v2507 = vld [vmem:[%s2452 + $0x51] sm:$0xff]
        %v2508 = vld [vmem:[%s2452 + $0x61] sm:$0xff]
        %v2509 = vld [vmem:[%s2452 + $0x71] sm:$0xff]
        %2518 = vrot.lane.b32.xlu0 %v2502, 28
        %v2519 = vpop.permute.xlu0 %2518
        %2520 = vrot.lane.b32.xlu0 %v2503, 28
        %v2521 = vpop.permute.xlu0 %2520
        %2522 = vrot.lane.b32.xlu0 %v2504, 28
        %v2523 = vpop.permute.xlu0 %2522
        %2524 = vrot.lane.b32.xlu0 %v2505, 28
        %v2525 = vpop.permute.xlu0 %2524
        %2526 = vrot.lane.b32.xlu0 %v2506, 28
        %v2527 = vpop.permute.xlu0 %2526
        %2528 = vrot.lane.b32.xlu0 %v2507, 28
        %v2529 = vpop.permute.xlu0 %2528
        %2530 = vrot.lane.b32.xlu0 %v2508, 28
        %v2531 = vpop.permute.xlu0 %2530
        %2532 = vrot.lane.b32.xlu0 %v2509, 28
        %v2533 = vpop.permute.xlu0 %2532
        %vm2542 = vcmask 261344
        %2543 = vst.msk [vmem:[#allocation3] sm:$0xff] %vm2542, %v2519
        %2544 = vst.msk [vmem:[#allocation3 + $0x8] sm:$0xff] %vm2542, %v2521
        %2545 = vst.msk [vmem:[#allocation3 + $0x10] sm:$0xff] %vm2542, %v2523
        %2546 = vst.msk [vmem:[#allocation3 + $0x18] sm:$0xff] %vm2542, %v2525
        %2547 = vst.msk [vmem:[#allocation3 + $0x20] sm:$0xff] %vm2542, %v2527
        %2548 = vst.msk [vmem:[#allocation3 + $0x28] sm:$0xff] %vm2542, %v2529
        %2549 = vst.msk [vmem:[#allocation3 + $0x30] sm:$0xff] %vm2542, %v2531
        %2550 = vst.msk [vmem:[#allocation3 + $0x38] sm:$0xff] %vm2542, %v2533
        %v2551 = vld [vmem:[%s2452 + $0x2] sm:$0xff]
        %v2552 = vld [vmem:[%s2452 + $0x12] sm:$0xff]
        %v2553 = vld [vmem:[%s2452 + $0x22] sm:$0xff]
        %v2554 = vld [vmem:[%s2452 + $0x32] sm:$0xff]
        %v2555 = vld [vmem:[%s2452 + $0x42] sm:$0xff]
        %v2556 = vld [vmem:[%s2452 + $0x52] sm:$0xff]
        %v2557 = vld [vmem:[%s2452 + $0x62] sm:$0xff]
        %v2558 = vld [vmem:[%s2452 + $0x72] sm:$0xff]
        %2567 = vrot.lane.b32.xlu0 %v2551, 32
        %v2568 = vpop.permute.xlu0 %2567
        %2569 = vrot.lane.b32.xlu0 %v2552, 32
        %v2570 = vpop.permute.xlu0 %2569
        %2571 = vrot.lane.b32.xlu0 %v2553, 32
        %v2572 = vpop.permute.xlu0 %2571
        %2573 = vrot.lane.b32.xlu0 %v2554, 32
        %v2574 = vpop.permute.xlu0 %2573
        %2575 = vrot.lane.b32.xlu0 %v2555, 32
        %v2576 = vpop.permute.xlu0 %2575
        %2577 = vrot.lane.b32.xlu0 %v2556, 32
        %v2578 = vpop.permute.xlu0 %2577
        %2579 = vrot.lane.b32.xlu0 %v2557, 32
        %v2580 = vpop.permute.xlu0 %2579
        %2581 = vrot.lane.b32.xlu0 %v2558, 32
        %v2582 = vpop.permute.xlu0 %2581
        %vm2591 = vcmask 294144
        %2592 = vst.msk [vmem:[#allocation3] sm:$0xff] %vm2591, %v2568
        %2593 = vst.msk [vmem:[#allocation3 + $0x8] sm:$0xff] %vm2591, %v2570
        %2594 = vst.msk [vmem:[#allocation3 + $0x10] sm:$0xff] %vm2591, %v2572
        %2595 = vst.msk [vmem:[#allocation3 + $0x18] sm:$0xff] %vm2591, %v2574
        %2596 = vst.msk [vmem:[#allocation3 + $0x20] sm:$0xff] %vm2591, %v2576
        %2597 = vst.msk [vmem:[#allocation3 + $0x28] sm:$0xff] %vm2591, %v2578
        %2598 = vst.msk [vmem:[#allocation3 + $0x30] sm:$0xff] %vm2591, %v2580
        %2599 = vst.msk [vmem:[#allocation3 + $0x38] sm:$0xff] %vm2591, %v2582
        %v2600 = vld [vmem:[#allocation3] sm:$0xff]
        %v2601 = vld [vmem:[#allocation3 + $0x8] sm:$0xff]
        %v2602 = vld [vmem:[#allocation3 + $0x10] sm:$0xff]
        %v2603 = vld [vmem:[#allocation3 + $0x18] sm:$0xff]
        %v2604 = vld [vmem:[#allocation3 + $0x20] sm:$0xff]
        %v2605 = vld [vmem:[#allocation3 + $0x28] sm:$0xff]
        %v2606 = vld [vmem:[#allocation3 + $0x30] sm:$0xff]
        %v2607 = vld [vmem:[#allocation3 + $0x38] sm:$0xff]
        %v2608 = vld [vmem:[%s1] sm:$0xff]
        %v2609 = vld [vmem:[%s1 + $0x8] sm:$0xff]
        %v2610 = vld [vmem:[%s1 + $0x10] sm:$0xff]
        %v2611 = vld [vmem:[%s1 + $0x18] sm:$0xff]
        %v2612 = vld [vmem:[%s1 + $0x20] sm:$0xf]
        %vm2613 = vcmask 293888
        %v2615 = vsel %vm2613, %v2600, 0
        %v2618 = vsel %vm2613, %v2601, 0
        %v2621 = vsel %vm2613, %v2602, 0
        %v2624 = vsel %vm2613, %v2603, 0
        %v2627 = vsel %vm2613, %v2604, 0
        %v2630 = vsel %vm2613, %v2605, 0
        %v2633 = vsel %vm2613, %v2606, 0
        %v2636 = vsel %vm2613, %v2607, 0
        %vm2638 = vcmask 1043456
        %v2640 = vsel %vm2638, %v2612, 0
        %2642 = vmatprep.subr.mxu0 0.0
        %2643 = vmatpush1.msra.mxu0 0.0
        %2644 = vmatprep.subr.mxu0 0.0
        %2645 = vmatpush1.msra.mxu0 0.0
        %2646 = vmatprep.subr.mxu0 0.0
        %2647 = vmatpush1.msra.mxu0 0.0
        %2648 = vmatprep.subr.mxu0 0.0
        %2649 = vmatpush1.msra.mxu0 0.0
        %2650 = vmatprep.subr.mxu0 0.0
        %2651 = vmatpush1.msra.mxu0 0.0
        %2652 = vmatprep.subr.mxu0 0.0
        %2653 = vmatpush1.msra.mxu0 0.0
        %2654 = vmatprep.subr.mxu0 0.0
        %2655 = vmatpush1.msra.mxu0 0.0
        %2656 = vmatprep.subr.mxu0 0.0
        %2657 = vmatpush1.msra.mxu0 0.0
        %2658 = vmatprep.subr.mxu0 0.0
        %2659 = vmatpush1.msra.mxu0 0.0
        %2660 = vmatprep.subr.mxu0 0.0
        %2661 = vmatpush1.msra.mxu0 0.0
        %2662 = vmatprep.subr.mxu0 0.0
        %2663 = vmatpush1.msra.mxu0 0.0
        %2664 = vmatprep.subr.mxu0 0.0
        %2665 = vmatpush1.msra.mxu0 %v2640
        %2666 = vmatprep.subr.mxu0 0.0
        %2667 = vmatpush1.msra.mxu0 %v2611
        %2668 = vmatprep.subr.mxu0 0.0
        %2669 = vmatpush1.msra.mxu0 %v2610
        %2670 = vmatprep.subr.mxu0 0.0
        %2671 = vmatpush1.msra.mxu0 %v2609
        %2672 = vmatprep.subr.mxu0 0.0
        %2673 = vmatpush1.msra.mxu0 %v2608
        %2674 = vmatprep.subr.mxu0 0.0
        %2675 = vmatpush2.msra.mxu0 0.0
        %2676 = vmatprep.subr.mxu0 0.0
        %2677 = vmatpush2.msra.mxu0 0.0
        %2678 = vmatprep.subr.mxu0 0.0
        %2679 = vmatpush2.msra.mxu0 0.0
        %2680 = vmatprep.subr.mxu0 0.0
        %2681 = vmatpush2.msra.mxu0 0.0
        %2682 = vmatprep.subr.mxu0 0.0
        %2683 = vmatpush2.msra.mxu0 0.0
        %2684 = vmatprep.subr.mxu0 0.0
        %2685 = vmatpush2.msra.mxu0 0.0
        %2686 = vmatprep.subr.mxu0 0.0
        %2687 = vmatpush2.msra.mxu0 0.0
        %2688 = vmatprep.subr.mxu0 0.0
        %2689 = vmatpush2.msra.mxu0 0.0
        %2690 = vmatprep.subr.mxu0 0.0
        %2691 = vmatpush2.msra.mxu0 0.0
        %2692 = vmatprep.subr.mxu0 0.0
        %2693 = vmatpush2.msra.mxu0 0.0
        %2694 = vmatprep.subr.mxu0 0.0
        %2695 = vmatpush2.msra.mxu0 0.0
        %2696 = vmatprep.subr.mxu0 0.0
        %2697 = vmatpush2.msra.mxu0 0.0
        %2698 = vmatprep.subr.mxu0 0.0
        %2699 = vmatpush2.msra.mxu0 0.0
        %2700 = vmatprep.subr.mxu0 0.0
        %2701 = vmatpush2.msra.mxu0 0.0
        %2702 = vmatprep.subr.mxu0 0.0
        %2703 = vmatpush2.msra.mxu0 0.0
        %2704 = vmatprep.subr.mxu0 0.0
        %2705 = vmatpush2.msra.mxu0 0.0
        %2706 = vmatprep.mubr.f32.mxu0 0.0
        %2707 = vmatmul.mubr.f32.gmra.mxu0 %v2615
        %v2708 = vpop.f32.mrf.mxu0
        %v2709 = vadd.f32 0.0, %v2708
        %v2710 = vpop.f32.mrf.mxu0
        %2711 = vmatprep.mubr.f32.mxu0 0.0
        %2712 = vmatmul.mubr.f32.gmra.mxu0 %v2618
        %v2713 = vpop.f32.mrf.mxu0
        %v2714 = vadd.f32 0.0, %v2713
        %v2715 = vpop.f32.mrf.mxu0
        %2716 = vmatprep.mubr.f32.mxu0 0.0
        %2717 = vmatmul.mubr.f32.gmra.mxu0 %v2621
        %v2718 = vpop.f32.mrf.mxu0
        %v2719 = vadd.f32 0.0, %v2718
        %v2720 = vpop.f32.mrf.mxu0
        %2721 = vmatprep.mubr.f32.mxu0 0.0
        %2722 = vmatmul.mubr.f32.gmra.mxu0 %v2624
        %v2723 = vpop.f32.mrf.mxu0
        %v2724 = vadd.f32 0.0, %v2723
        %v2725 = vpop.f32.mrf.mxu0
        %2726 = vmatprep.mubr.f32.mxu0 0.0
        %2727 = vmatmul.mubr.f32.gmra.mxu0 %v2627
        %v2728 = vpop.f32.mrf.mxu0
        %v2729 = vadd.f32 0.0, %v2728
        %v2730 = vpop.f32.mrf.mxu0
        %2731 = vmatprep.mubr.f32.mxu0 0.0
        %2732 = vmatmul.mubr.f32.gmra.mxu0 %v2630
        %v2733 = vpop.f32.mrf.mxu0
        %v2734 = vadd.f32 0.0, %v2733
        %v2735 = vpop.f32.mrf.mxu0
        %2736 = vmatprep.mubr.f32.mxu0 0.0
        %2737 = vmatmul.mubr.f32.gmra.mxu0 %v2633
        %v2738 = vpop.f32.mrf.mxu0
        %v2739 = vadd.f32 0.0, %v2738
        %v2740 = vpop.f32.mrf.mxu0
        %2741 = vmatprep.mubr.f32.mxu0 0.0
        %2742 = vmatmul.mubr.f32.gmra.mxu0 %v2636
        %v2743 = vpop.f32.mrf.mxu0
        %v2744 = vadd.f32 0.0, %v2743
        %v2745 = vpop.f32.mrf.mxu0
        %2746 = vdwg.mxu0
        %2747 = vxpose.xlu0.b32.start [1/16] %v2709, 128
        %2748 = vxpose.xlu0.b32.cont [2/16] %v2714, 128
        %2749 = vxpose.xlu0.b32.cont [3/16] %v2719, 128
        %2750 = vxpose.xlu0.b32.cont [4/16] %v2724, 128
        %2751 = vxpose.xlu0.b32.cont [5/16] %v2729, 128
        %2752 = vxpose.xlu0.b32.cont [6/16] %v2734, 128
        %2753 = vxpose.xlu0.b32.cont [7/16] %v2739, 128
        %2754 = vxpose.xlu0.b32.cont [8/16] %v2744, 128
        %2755 = vxpose.xlu0.b32.cont [9/16] 0.0, 128
        %2756 = vxpose.xlu0.b32.cont [10/16] 0.0, 128
        %2757 = vxpose.xlu0.b32.cont [11/16] 0.0, 128
        %2758 = vxpose.xlu0.b32.cont [12/16] 0.0, 128
        %2759 = vxpose.xlu0.b32.cont [13/16] 0.0, 128
        %2760 = vxpose.xlu0.b32.cont [14/16] 0.0, 128
        %2761 = vxpose.xlu0.b32.cont [15/16] 0.0, 128
        %2762 = vxpose.xlu0.b32.end [16/16] 0.0, 128
        %v2763 = vpop.trf.xlu0
        %v2764 = vpop.trf.xlu0
        %v2765 = vpop.trf.xlu0
        %v2766 = vpop.trf.xlu0
        %v2767 = vpop.trf.xlu0
        %v2768 = vpop.trf.xlu0
        %v2769 = vpop.trf.xlu0
        %v2770 = vpop.trf.xlu0
        %v2771 = vpop.trf.xlu0
        %v2772 = vpop.trf.xlu0
        %v2773 = vpop.trf.xlu0
        %v2774 = vpop.trf.xlu0
        %v2775 = vpop.trf.xlu0
        %v2776 = vpop.trf.xlu0
        %v2777 = vpop.trf.xlu0
        %v2778 = vpop.trf.xlu0
        %vm2779 = vcmask 523264
        %2780 = vst.msk [vmem:[%s182] sm:$0xff] %vm2779, %v2763
        %v2781 = vld [vmem:[#allocation6] sm:$0x1]
        %vm2782 = vcmask 64512
        %v2783 = vsel %vm2782, %v2709, 0.0
        %v2784 = vsel %vm2782, %v2714, 0.0
        %v2785 = vadd.f32 %v2783, %v2784
        %v2786 = vsel %vm2782, %v2719, 0.0
        %v2787 = vadd.f32 %v2785, %v2786
        %v2788 = vsel %vm2782, %v2724, 0.0
        %v2789 = vadd.f32 %v2787, %v2788
        %v2790 = vsel %vm2782, %v2729, 0.0
        %v2791 = vadd.f32 %v2789, %v2790
        %v2792 = vsel %vm2782, %v2734, 0.0
        %v2793 = vadd.f32 %v2791, %v2792
        %v2794 = vsel %vm2782, %v2739, 0.0
        %v2795 = vadd.f32 %v2793, %v2794
        %v2796 = vsel %vm2782, %v2744, 0.0
        %v2797 = vadd.f32 %v2795, %v2796
        %v2798 = vrot.slane %v2797, 4
        %v2799 = vadd.f32 %v2797, %v2798
        %v2800 = vrot.slane %v2799, 2
        %v2801 = vadd.f32 %v2799, %v2800
        %v2802 = vrot.slane %v2801, 1
        %v2803 = vadd.f32 %v2801, %v2802
        %v2804 = vadd.f32 %v2781, %v2803
        %vm2805 = vcmask 57344
        %2806 = vst.msk [vmem:[#allocation6] sm:$0x1] %vm2805, %v2804
        %v2807 = vld [vmem:[#allocation8] sm:$0x1]
        %v2808 = vmul.f32 %v2709, %v2709
        %v2809 = vmul.f32 %v2714, %v2714
        %v2810 = vmul.f32 %v2719, %v2719
        %v2811 = vmul.f32 %v2724, %v2724
        %v2812 = vmul.f32 %v2729, %v2729
        %v2813 = vmul.f32 %v2734, %v2734
        %v2814 = vmul.f32 %v2739, %v2739
        %v2815 = vmul.f32 %v2744, %v2744
        %v2816 = vsel %vm2782, %v2808, 0.0
        %v2817 = vsel %vm2782, %v2809, 0.0
        %v2818 = vadd.f32 %v2816, %v2817
        %v2819 = vsel %vm2782, %v2810, 0.0
        %v2820 = vadd.f32 %v2818, %v2819
        %v2821 = vsel %vm2782, %v2811, 0.0
        %v2822 = vadd.f32 %v2820, %v2821
        %v2823 = vsel %vm2782, %v2812, 0.0
        %v2824 = vadd.f32 %v2822, %v2823
        %v2825 = vsel %vm2782, %v2813, 0.0
        %v2826 = vadd.f32 %v2824, %v2825
        %v2827 = vsel %vm2782, %v2814, 0.0
        %v2828 = vadd.f32 %v2826, %v2827
        %v2829 = vsel %vm2782, %v2815, 0.0
        %v2830 = vadd.f32 %v2828, %v2829
        %v2831 = vrot.slane %v2830, 4
        %v2832 = vadd.f32 %v2830, %v2831
        %v2833 = vrot.slane %v2832, 2
        %v2834 = vadd.f32 %v2832, %v2833
        %v2835 = vrot.slane %v2834, 1
        %v2836 = vadd.f32 %v2834, %v2835
        %v2837 = vadd.f32 %v2807, %v2836
        %2838 = vst.msk [vmem:[#allocation8] sm:$0x1] %vm2805, %v2837
        %s2839 = sand.u32 %s75, 1
        %s2840 = scalar_lea.sflag [#allocation5], %s2839
        %s2841 = sand.u32 %s75, 1
        %s2842 = smul.addr %s2841, 8
        %s2843 = scalar_lea.vmem [#allocation4], %s2842
        // Predicated region
        $region33: #{tpu_custom_call.1} parent=27 // pred_check
          %p2844 = pneg %p85
        $region34: #{tpu_custom_call.1} parent=27 // pred_check_branch
          %2846 = sbr.rel (%p2844) target = $region36
        $region35: #{tpu_custom_call.1} parent=27 // pred_region
          %s2848 = ssub.s32 128, 128
          %2849 = vsyncadd %s2840, %s2848
          %s2850 = smul.addr %s20, 128
          %s2851 = scalar_lea.hbm %s2, %s2850
          %s2853 = sshll.u32 %s2843, 4
          %s2854 = int_to_ptr.vmem [resolvable:$true] %s2853
          %2856 = dma.vmem_to_hbm [thread:$0]  %s2854, 128, %s2851, %s2840
        $region36: #{tpu_custom_call.1} parent=27 // pred_fallthru
          _
        // Predicated region
        $region37: #{tpu_custom_call.1} parent=27 // pred_check
          %p2857 = pneg %p106
        $region38: #{tpu_custom_call.1} parent=27 // pred_check_branch
          %2859 = sbr.rel (%p2857) target = $region40
        $region39: #{tpu_custom_call.1} parent=27 // pred_region
          %s2861 = ssub.s32 16, 16
          %2862 = vsyncadd [#allocation7], %s2861
          %s2864 = sshll.u32 [#allocation6], 4
          %s2865 = int_to_ptr.vmem [resolvable:$true] %s2864
          %2867 = dma.vmem_to_hbm [thread:$0]  %s2865, 16, %s3, [#allocation7]
        $region40: #{tpu_custom_call.1} parent=27 // pred_fallthru
          _
        // Predicated region
        $region41: #{tpu_custom_call.1} parent=27 // pred_check
          %p2868 = pneg %p127
        $region42: #{tpu_custom_call.1} parent=27 // pred_check_branch
          %2870 = sbr.rel (%p2868) target = $region44
        $region43: #{tpu_custom_call.1} parent=27 // pred_region
          %s2872 = ssub.s32 16, 16
          %2873 = vsyncadd [#allocation7], %s2872
          %s2875 = sshll.u32 [#allocation8], 4
          %s2876 = int_to_ptr.vmem [resolvable:$true] %s2875
          %2878 = dma.vmem_to_hbm [thread:$0]  %s2876, 16, %s4, [#allocation7]
        $region44: #{tpu_custom_call.1} parent=27 // pred_fallthru
          _
        // Predicated region
        $region45: #{tpu_custom_call.1} parent=27 // pred_check
          %p2879 = pneg %p106
        $region46: #{tpu_custom_call.1} parent=27 // pred_check_branch
          %2881 = sbr.rel (%p2879) target = $region48
        $region47: #{tpu_custom_call.1} parent=27 // pred_region
          %2882 = dma.done [#allocation7], 16
        $region48: #{tpu_custom_call.1} parent=27 // pred_fallthru
          _
        // Predicated region
        $region49: #{tpu_custom_call.1} parent=27 // pred_check
          %p2883 = pneg %p127
        $region50: #{tpu_custom_call.1} parent=27 // pred_check_branch
          %2885 = sbr.rel (%p2883) target = $region52
        $region51: #{tpu_custom_call.1} parent=27 // pred_region
          %2886 = dma.done [#allocation7], 16
        $region52: #{tpu_custom_call.1} parent=27 // pred_fallthru
          _
      $region28: #{tpu_custom_call.1} parent=5 // pred_fallthru
        _
      %p2887 = scmp.le.s32.totalorder 2, %s15
      // Predicated region
      $region53: #{tpu_custom_call.1} parent=5 // pred_check
        %p2888 = pneg %p2887
      $region54: #{tpu_custom_call.1} parent=5 // pred_check_branch
        %2890 = sbr.rel (%p2888) target = $region56
      $region55: #{tpu_custom_call.1} parent=5 // pred_region
        %s2891 = ssub.s32 %s15, 2
        // Predicated region
        $region57: #{tpu_custom_call.1} parent=55 // pred_check
          %p2892 = pneg %p91
        $region58: #{tpu_custom_call.1} parent=55 // pred_check_branch
          %2894 = sbr.rel (%p2892) target = $region60
        $region59: #{tpu_custom_call.1} parent=55 // pred_region
          %s2895 = sand.u32 %s76, 1
          %s2896 = scalar_lea.sflag [#allocation5], %s2895
          %s2897 = sand.u32 %s76, 1
          %s2898 = smul.addr %s2897, 8
          %s2899 = scalar_lea.vmem [#allocation4], %s2898
          %2900 = dma.done %s2896, 128
        $region60: #{tpu_custom_call.1} parent=55 // pred_fallthru
          _
      $region56: #{tpu_custom_call.1} parent=5 // pred_fallthru
        _
    $region6: #{tpu_custom_call.1} parent=1 // loop_footer
      %s19 = sadd.s32 1, %s15
    $region7: #{tpu_custom_call.1} parent=1 // loop_footer_branch
      %14 = sbr.rel target = $region3
    $region8: #{tpu_custom_call.1} parent=1 // loop_exit
      _
    %2901 = vsyncpa [#allocation5], 1
    %s2902 = scalar_lea.sflag [#allocation5], 1
    %2903 = vsyncpa %s2902, 1
    %2904 = vsyncpa [#allocation7], 1

</llo_original>
